<compile_context>
chip_gen: v7x
topology: tpu7x:2x2x1
jax: 0.10.0
libtpu: 0.0.40
codegen_flags: <defaults>
</compile_context>

<pallas_src>
import functools

import jax
import jax.numpy as jnp
from jax.experimental import pallas as pl
from jax.experimental.pallas import tpu as pltpu


def _round_up(x, m):
    return ((x + m - 1) // m) * m


# ---------------------------------------------------------------------------
# Kernel
# ---------------------------------------------------------------------------
def tree_lstm_kernel(x_ref, hl_ref, hr_ref, cl_ref, cr_ref, w_ref, b_ref,
                     h_ref, c_ref, *, in_pad, h_pad):
    """Fused BinaryTreeLSTMCell step for one batch tile.

    x_ref  : [tb, in_pad]               bf16
    hl_ref : [tb, h_pad]                bf16
    hr_ref : [tb, h_pad]                bf16
    cl_ref : [tb, h_pad]                f32
    cr_ref : [tb, h_pad]                f32
    w_ref  : [in_pad + 2*h_pad, 5*h_pad] bf16, fused pre-transposed weights,
             row blocks = [x | hl | hr], gate columns = [i | o | u | fl | fr]
    b_ref  : [1, 5*h_pad]               f32 fused bias
    h_ref  : [tb, h_pad]                f32 output h
    c_ref  : [tb, h_pad]                f32 output c
    """
    # MXU matmuls against 128-aligned row-slices of the VMEM-resident weight
    # slab; bf16 operands, f32 accumulation.
    gates = (
        jnp.dot(x_ref[...], w_ref[0:in_pad, :],
                preferred_element_type=jnp.float32)
        + jnp.dot(hl_ref[...], w_ref[in_pad:in_pad + h_pad, :],
                  preferred_element_type=jnp.float32)
        + jnp.dot(hr_ref[...], w_ref[in_pad + h_pad:in_pad + 2 * h_pad, :],
                  preferred_element_type=jnp.float32)
        + b_ref[...]
    )

    # Gate activations on the EUP (transcendental slot), all f32.
    i = jax.nn.sigmoid(gates[:, 0 * h_pad:1 * h_pad])
    o = jax.nn.sigmoid(gates[:, 1 * h_pad:2 * h_pad])
    u = jnp.tanh(gates[:, 2 * h_pad:3 * h_pad])
    fl = jax.nn.sigmoid(gates[:, 3 * h_pad:4 * h_pad])
    fr = jax.nn.sigmoid(gates[:, 4 * h_pad:5 * h_pad])

    c = i * u + fl * cl_ref[...] + fr * cr_ref[...]
    # Lane-dense, 128-aligned, unmasked stores.
    h_ref[...] = o * jnp.tanh(c)
    c_ref[...] = c


# ---------------------------------------------------------------------------
# One-time parameter fusion (hoisted out of the per-cell call)
# ---------------------------------------------------------------------------
def pack_params(p, in_dim, h_dim):
    """Fuse the 9 Linear layers into one bf16 [in_pad+2*h_pad, 5*h_pad] slab
    plus one f32 bias row. Pre-transposed ([in, out]) so the kernel never
    transposes. Call ONCE per model, not per cell invocation."""
    in_pad = _round_up(in_dim, 128)
    h_pad = _round_up(h_dim, 128)

    W = jnp.zeros((in_pad + 2 * h_pad, 5 * h_pad), jnp.float32)
    b = jnp.zeros((5 * h_pad,), jnp.float32)

    # PyTorch Linear: y = a @ W.T + b, W stored [out, in].
    Wi_x, Wo_x, Wu_x = jnp.split(p["W_iou_x"], 3, axis=0)
    Wi_hl, Wo_hl, Wu_hl = jnp.split(p["W_iou_hl"], 3, axis=0)
    Wi_hr, Wo_hr, Wu_hr = jnp.split(p["W_iou_hr"], 3, axis=0)
    bi_x, bo_x, bu_x = jnp.split(p["b_iou_x"], 3)
    bi_hl, bo_hl, bu_hl = jnp.split(p["b_iou_hl"], 3)
    bi_hr, bo_hr, bu_hr = jnp.split(p["b_iou_hr"], 3)

    row_x, row_hl, row_hr = 0, in_pad, in_pad + h_pad

    def put(W, r0, gate, w_out_in):
        wt = w_out_in.T  # [in_*, h_dim] pre-transposed
        return W.at[r0:r0 + wt.shape[0],
                    gate * h_pad:gate * h_pad + h_dim].set(wt)

    # i / o / u columns
    W = put(W, row_x, 0, Wi_x); W = put(W, row_hl, 0, Wi_hl); W = put(W, row_hr, 0, Wi_hr)
    W = put(W, row_x, 1, Wo_x); W = put(W, row_hl, 1, Wo_hl); W = put(W, row_hr, 1, Wo_hr)
    W = put(W, row_x, 2, Wu_x); W = put(W, row_hl, 2, Wu_hl); W = put(W, row_hr, 2, Wu_hr)
    # fl = sigmoid(f_x(x) + f_h[0][0](hr) + f_h[0][1](hl))
    W = put(W, row_x, 3, p["W_fx"]); W = put(W, row_hr, 3, p["W_f00"]); W = put(W, row_hl, 3, p["W_f01"])
    # fr = sigmoid(f_x(x) + f_h[1][0](hr) + f_h[1][1](hl))
    W = put(W, row_x, 4, p["W_fx"]); W = put(W, row_hr, 4, p["W_f10"]); W = put(W, row_hl, 4, p["W_f11"])

    def putb(b, gate, vec):
        return b.at[gate * h_pad:gate * h_pad + h_dim].set(vec)

    b = putb(b, 0, bi_x + bi_hl + bi_hr)
    b = putb(b, 1, bo_x + bo_hl + bo_hr)
    b = putb(b, 2, bu_x + bu_hl + bu_hr)
    b = putb(b, 3, p["b_fx"] + p["b_f00"] + p["b_f01"])
    b = putb(b, 4, p["b_fx"] + p["b_f10"] + p["b_f11"])

    return W.astype(jnp.bfloat16), b.reshape(1, 5 * h_pad)


# ---------------------------------------------------------------------------
# Wrapper
# ---------------------------------------------------------------------------
def binary_tree_lstm_cell(x, hl, hr, cl, cr, w_big, b_big, *, tile_b=256):
    """One BinaryTreeLSTMCell forward for a batch of tree nodes.

    w_big / b_big come from pack_params (call once per model). Returns (h, c).
    tile_b: batch-tile size (256 good for v6e/v7x; use 128 on v5e).
    """
    B, in_dim = x.shape
    h_dim = hl.shape[1]
    in_pad = _round_up(in_dim, 128)
    h_pad = _round_up(h_dim, 128)
    K = in_pad + 2 * h_pad
    N = 5 * h_pad
    assert w_big.shape == (K, N), (w_big.shape, (K, N))

    # bf16 MXU operands require the sublane (batch) pad to be a multiple of 16.
    if B > tile_b:
        b_pad = _round_up(B, tile_b)
    else:
        b_pad = _round_up(B, 16)
        tile_b = b_pad

    def padded(a, cols, dtype):
        a = a.astype(dtype)
        return jnp.pad(a, ((0, b_pad - a.shape[0]), (0, cols - a.shape[1])))

    x_p = padded(x, in_pad, jnp.bfloat16)
    hl_p = padded(hl, h_pad, jnp.bfloat16)
    hr_p = padded(hr, h_pad, jnp.bfloat16)
    cl_p = padded(cl, h_pad, jnp.float32)   # cell state stays f32
    cr_p = padded(cr, h_pad, jnp.float32)

    grid = (b_pad // tile_b,)
    row = lambda i: (i, 0)     # batch-tiled operands
    const = lambda i: (0, 0)   # VMEM-resident weights/bias (DMA'd once)

    cost = pl.CostEstimate(
        flops=2 * b_pad * K * N + 10 * b_pad * h_pad,
        transcendentals=6 * b_pad * h_pad,
        bytes_accessed=(w_big.size * 2 + b_big.size * 4
                        + (x_p.size + hl_p.size + hr_p.size) * 2
                        + (cl_p.size + cr_p.size) * 4
                        + 2 * b_pad * h_pad * 4),
    )

    h_out, c_out = pl.pallas_call(
        functools.partial(tree_lstm_kernel, in_pad=in_pad, h_pad=h_pad),
        out_shape=(jax.ShapeDtypeStruct((b_pad, h_pad), jnp.float32),
                   jax.ShapeDtypeStruct((b_pad, h_pad), jnp.float32)),
        grid=grid,
        in_specs=[pl.BlockSpec((tile_b, in_pad), row),
                  pl.BlockSpec((tile_b, h_pad), row),
                  pl.BlockSpec((tile_b, h_pad), row),
                  pl.BlockSpec((tile_b, h_pad), row),
                  pl.BlockSpec((tile_b, h_pad), row),
                  pl.BlockSpec((K, N), const),
                  pl.BlockSpec((1, N), const)],
        out_specs=(pl.BlockSpec((tile_b, h_pad), row),
                   pl.BlockSpec((tile_b, h_pad), row)),
        compiler_params=pltpu.CompilerParams(
            dimension_semantics=("parallel",),
            vmem_limit_bytes=32 * 1024 * 1024),
        cost_estimate=cost,
    )(x_p, hl_p, hr_p, cl_p, cr_p, w_big, b_big)

    return h_out[:B, :h_dim], c_out[:B, :h_dim]


# ---------------------------------------------------------------------------
# Parameter init + pure-JAX reference (mirrors the PyTorch module)
# ---------------------------------------------------------------------------
def init_params(key, in_dim, h_dim):
    ks = jax.random.split(key, 16)

    def lin(kw, kb, out_dim, inp_dim):
        s = 1.0 / jnp.sqrt(inp_dim)
        W = jax.random.uniform(kw, (out_dim, inp_dim), jnp.float32, -s, s)
        b = jax.random.uniform(kb, (out_dim,), jnp.float32, -s, s)
        return W, b

    p = {}
    p["W_iou_x"], p["b_iou_x"] = lin(ks[0], ks[1], 3 * h_dim, in_dim)
    p["W_iou_hl"], p["b_iou_hl"] = lin(ks[2], ks[3], 3 * h_dim, h_dim)
    p["W_iou_hr"], p["b_iou_hr"] = lin(ks[4], ks[5], 3 * h_dim, h_dim)
    p["W_fx"], p["b_fx"] = lin(ks[6], ks[7], h_dim, in_dim)
    p["W_f00"], p["b_f00"] = lin(ks[8], ks[9], h_dim, h_dim)
    p["W_f01"], p["b_f01"] = lin(ks[10], ks[11], h_dim, h_dim)
    p["W_f10"], p["b_f10"] = lin(ks[12], ks[13], h_dim, h_dim)
    p["W_f11"], p["b_f11"] = lin(ks[14], ks[15], h_dim, h_dim)
    return p


def reference(x, hl, hr, cl, cr, p):
    """Pure-JAX f32 reference reproducing the PyTorch forward, unfused."""
    def lin(a, W, b):
        return a @ W.T + b

    iou = (lin(x, p["W_iou_x"], p["b_iou_x"])
           + lin(hl, p["W_iou_hl"], p["b_iou_hl"])
           + lin(hr, p["W_iou_hr"], p["b_iou_hr"]))
    H = iou.shape[1] // 3
    i, o, u = iou[:, :H], iou[:, H:2 * H], iou[:, 2 * H:]
    i, o, u = jax.nn.sigmoid(i), jax.nn.sigmoid(o), jnp.tanh(u)
    fl = jax.nn.sigmoid(lin(x, p["W_fx"], p["b_fx"])
                        + lin(hr, p["W_f00"], p["b_f00"])
                        + lin(hl, p["W_f01"], p["b_f01"]))
    fr = jax.nn.sigmoid(lin(x, p["W_fx"], p["b_fx"])
                        + lin(hr, p["W_f10"], p["b_f10"])
                        + lin(hl, p["W_f11"], p["b_f11"]))
    c = i * u + fl * cl + fr * cr
    h = o * jnp.tanh(c)
    return h, c


if __name__ == "__main__":
    in_dim, h_dim = 32, 32

    key = jax.random.PRNGKey(0)
    kp, kd = jax.random.split(key, 2)
    params = init_params(kp, in_dim, h_dim)
    # Pack the 9 Linear layers ONCE per model (hoisted out of the cell call).
    W_big, b_big = pack_params(params, in_dim, h_dim)

    def make_inputs(k, B):
        ks = jax.random.split(k, 5)
        x = jax.random.normal(ks[0], (B, in_dim), jnp.float32) * 0.5
        hl = jax.random.normal(ks[1], (B, h_dim), jnp.float32) * 0.5
        hr = jax.random.normal(ks[2], (B, h_dim), jnp.float32) * 0.5
        cl = jax.random.normal(ks[3], (B, h_dim), jnp.float32) * 0.5
        cr = jax.random.normal(ks[4], (B, h_dim), jnp.float32) * 0.5
        return x, hl, hr, cl, cr

    # Case 1: small batch (single grid step).
    x, hl, hr, cl, cr = make_inputs(kd, 8)
    h, c = binary_tree_lstm_cell(x, hl, hr, cl, cr, W_big, b_big)
    h = jax.block_until_ready(h)
    c = jax.block_until_ready(c)
    h_ref, c_ref = reference(x, hl, hr, cl, cr, params)
    # bf16 MXU operands -> looser tolerance vs the f32 reference.
    assert jnp.allclose(h, h_ref, atol=1e-2, rtol=1e-2), float(jnp.max(jnp.abs(h - h_ref)))
    assert jnp.allclose(c, c_ref, atol=1e-2, rtol=1e-2), float(jnp.max(jnp.abs(c - c_ref)))

    # Case 2: exercise the batch-tiled ("parallel") grid path.
    x2, hl2, hr2, cl2, cr2 = make_inputs(jax.random.PRNGKey(1), 40)
    h2, c2 = binary_tree_lstm_cell(x2, hl2, hr2, cl2, cr2, W_big, b_big, tile_b=16)
    h2 = jax.block_until_ready(h2)
    c2 = jax.block_until_ready(c2)
    h2_ref, c2_ref = reference(x2, hl2, hr2, cl2, cr2, params)
    assert jnp.allclose(h2, h2_ref, atol=1e-2, rtol=1e-2), float(jnp.max(jnp.abs(h2 - h2_ref)))
    assert jnp.allclose(c2, c2_ref, atol=1e-2, rtol=1e-2), float(jnp.max(jnp.abs(c2 - c2_ref)))

    print("KERNEL_OK")
</pallas_src>

<mosaic_0001>
module attributes {stable_mosaic.version = 11 : i64} {
  func.func @tree_lstm_kernel(%arg0: i32, %arg1: memref<16x128xbf16, #tpu.memory_space<vmem>>, %arg2: memref<16x128xbf16, #tpu.memory_space<vmem>>, %arg3: memref<16x128xbf16, #tpu.memory_space<vmem>>, %arg4: memref<16x128xf32, #tpu.memory_space<vmem>>, %arg5: memref<16x128xf32, #tpu.memory_space<vmem>>, %arg6: memref<384x640xbf16, #tpu.memory_space<vmem>>, %arg7: memref<1x640xf32, #tpu.memory_space<vmem>>, %arg8: memref<16x128xf32, #tpu.memory_space<vmem>>, %arg9: memref<16x128xf32, #tpu.memory_space<vmem>>) attributes {dimension_semantics = [#tpu.dimension_semantics<parallel>], iteration_bounds = array<i64: 1>, scalar_prefetch = 0 : i64, scratch_operands = 0 : i64, tpu.core_type = #tpu.core_type<tc>, window_params = [{transform_indices = @transform_0, window_bounds = array<i64: 16, 128>}, {transform_indices = @transform_1, window_bounds = array<i64: 16, 128>}, {transform_indices = @transform_2, window_bounds = array<i64: 16, 128>}, {transform_indices = @transform_3, window_bounds = array<i64: 16, 128>}, {transform_indices = @transform_4, window_bounds = array<i64: 16, 128>}, {pipeline_mode = #tpu.pipeline_mode<synchronous>, transform_indices = @transform_5, window_bounds = array<i64: 384, 640>}, {pipeline_mode = #tpu.pipeline_mode<synchronous>, transform_indices = @transform_6, window_bounds = array<i64: 1, 640>}, {transform_indices = @transform_7, window_bounds = array<i64: 16, 128>}, {transform_indices = @transform_8, window_bounds = array<i64: 16, 128>}]} {
    %c0 = arith.constant 0 : index
    %c0_0 = arith.constant 0 : index
    %0 = vector.load %arg1[%c0, %c0_0] : memref<16x128xbf16, #tpu.memory_space<vmem>>, vector<16x128xbf16>
    %c0_1 = arith.constant 0 : index
    %c0_2 = arith.constant 0 : index
    %1 = vector.load %arg6[%c0_1, %c0_2] : memref<384x640xbf16, #tpu.memory_space<vmem>>, vector<128x640xbf16>
    %cst = arith.constant dense<0.000000e+00> : vector<16x640xf32>
    %2 = tpu.matmul %0, %1, %cst {dimension_numbers = #tpu.dot_dimension_numbers<[1], [0], [0], [1], [0, 0, 1, 1], [], []>} : vector<16x128xbf16>, vector<128x640xbf16>, vector<16x640xf32> -> vector<16x640xf32>
    %c0_3 = arith.constant 0 : index
    %c0_4 = arith.constant 0 : index
    %3 = vector.load %arg2[%c0_3, %c0_4] : memref<16x128xbf16, #tpu.memory_space<vmem>>, vector<16x128xbf16>
    %c128 = arith.constant 128 : index
    %c0_5 = arith.constant 0 : index
    %4 = vector.load %arg6[%c128, %c0_5] : memref<384x640xbf16, #tpu.memory_space<vmem>>, vector<128x640xbf16>
    %cst_6 = arith.constant dense<0.000000e+00> : vector<16x640xf32>
    %5 = tpu.matmul %3, %4, %cst_6 {dimension_numbers = #tpu.dot_dimension_numbers<[1], [0], [0], [1], [0, 0, 1, 1], [], []>} : vector<16x128xbf16>, vector<128x640xbf16>, vector<16x640xf32> -> vector<16x640xf32>
    %6 = arith.addf %2, %5 : vector<16x640xf32>
    %c0_7 = arith.constant 0 : index
    %c0_8 = arith.constant 0 : index
    %7 = vector.load %arg3[%c0_7, %c0_8] : memref<16x128xbf16, #tpu.memory_space<vmem>>, vector<16x128xbf16>
    %c256 = arith.constant 256 : index
    %c0_9 = arith.constant 0 : index
    %8 = vector.load %arg6[%c256, %c0_9] : memref<384x640xbf16, #tpu.memory_space<vmem>>, vector<128x640xbf16>
    %cst_10 = arith.constant dense<0.000000e+00> : vector<16x640xf32>
    %9 = tpu.matmul %7, %8, %cst_10 {dimension_numbers = #tpu.dot_dimension_numbers<[1], [0], [0], [1], [0, 0, 1, 1], [], []>} : vector<16x128xbf16>, vector<128x640xbf16>, vector<16x640xf32> -> vector<16x640xf32>
    %10 = arith.addf %6, %9 : vector<16x640xf32>
    %c0_11 = arith.constant 0 : index
    %c0_12 = arith.constant 0 : index
    %11 = vector.load %arg7[%c0_11, %c0_12] : memref<1x640xf32, #tpu.memory_space<vmem>>, vector<1x640xf32>
    %12 = vector.broadcast %11 : vector<1x640xf32> to vector<16x640xf32>
    %13 = arith.addf %10, %12 : vector<16x640xf32>
    %14 = vector.extract_strided_slice %13 {offsets = [0, 0], sizes = [16, 128], strides = [1, 1]} : vector<16x640xf32> to vector<16x128xf32>
    %15 = arith.negf %14 : vector<16x128xf32>
    %16 = math.exp %15 : vector<16x128xf32>
    %cst_13 = arith.constant 1.000000e+00 : f32
    %17 = vector.broadcast %cst_13 : f32 to vector<16x128xf32>
    %18 = arith.addf %17, %16 : vector<16x128xf32>
    %19 = arith.divf %17, %18 : vector<16x128xf32>
    %20 = vector.extract_strided_slice %13 {offsets = [0, 128], sizes = [16, 128], strides = [1, 1]} : vector<16x640xf32> to vector<16x128xf32>
    %21 = arith.negf %20 : vector<16x128xf32>
    %22 = math.exp %21 : vector<16x128xf32>
    %cst_14 = arith.constant 1.000000e+00 : f32
    %23 = vector.broadcast %cst_14 : f32 to vector<16x128xf32>
    %24 = arith.addf %23, %22 : vector<16x128xf32>
    %25 = arith.divf %23, %24 : vector<16x128xf32>
    %26 = vector.extract_strided_slice %13 {offsets = [0, 256], sizes = [16, 128], strides = [1, 1]} : vector<16x640xf32> to vector<16x128xf32>
    %27 = math.tanh %26 : vector<16x128xf32>
    %28 = vector.extract_strided_slice %13 {offsets = [0, 384], sizes = [16, 128], strides = [1, 1]} : vector<16x640xf32> to vector<16x128xf32>
    %29 = arith.negf %28 : vector<16x128xf32>
    %30 = math.exp %29 : vector<16x128xf32>
    %cst_15 = arith.constant 1.000000e+00 : f32
    %31 = vector.broadcast %cst_15 : f32 to vector<16x128xf32>
    %32 = arith.addf %31, %30 : vector<16x128xf32>
    %33 = arith.divf %31, %32 : vector<16x128xf32>
    %34 = vector.extract_strided_slice %13 {offsets = [0, 512], sizes = [16, 128], strides = [1, 1]} : vector<16x640xf32> to vector<16x128xf32>
    %35 = arith.negf %34 : vector<16x128xf32>
    %36 = math.exp %35 : vector<16x128xf32>
    %cst_16 = arith.constant 1.000000e+00 : f32
    %37 = vector.broadcast %cst_16 : f32 to vector<16x128xf32>
    %38 = arith.addf %37, %36 : vector<16x128xf32>
    %39 = arith.divf %37, %38 : vector<16x128xf32>
    %40 = arith.mulf %19, %27 : vector<16x128xf32>
    %c0_17 = arith.constant 0 : index
    %c0_18 = arith.constant 0 : index
    %41 = vector.load %arg4[%c0_17, %c0_18] : memref<16x128xf32, #tpu.memory_space<vmem>>, vector<16x128xf32>
    %42 = arith.mulf %33, %41 : vector<16x128xf32>
    %43 = arith.addf %40, %42 : vector<16x128xf32>
    %c0_19 = arith.constant 0 : index
    %c0_20 = arith.constant 0 : index
    %44 = vector.load %arg5[%c0_19, %c0_20] : memref<16x128xf32, #tpu.memory_space<vmem>>, vector<16x128xf32>
    %45 = arith.mulf %39, %44 : vector<16x128xf32>
    %46 = arith.addf %43, %45 : vector<16x128xf32>
    %47 = math.tanh %46 : vector<16x128xf32>
    %48 = arith.mulf %25, %47 : vector<16x128xf32>
    %c0_21 = arith.constant 0 : index
    %c0_22 = arith.constant 0 : index
    %49 = vector.load %arg8[%c0_21, %c0_22] : memref<16x128xf32, #tpu.memory_space<vmem>>, vector<16x128xf32>
    tpu.vector_store %arg8[%c0_21, %c0_22], %48 {strides = array<i32>} : memref<16x128xf32, #tpu.memory_space<vmem>>, vector<16x128xf32>,
    %c0_23 = arith.constant 0 : index
    %c0_24 = arith.constant 0 : index
    %50 = vector.load %arg9[%c0_23, %c0_24] : memref<16x128xf32, #tpu.memory_space<vmem>>, vector<16x128xf32>
    tpu.vector_store %arg9[%c0_23, %c0_24], %46 {strides = array<i32>} : memref<16x128xf32, #tpu.memory_space<vmem>>, vector<16x128xf32>,
    return
  }
  func.func @transform_0(%arg0: i32) -> (i32, i32) {
    %c0_i32 = arith.constant 0 : i32
    %c0_i32_0 = arith.constant 0 : i32
    return %arg0, %c0_i32 : i32, i32
  }
  func.func @transform_1(%arg0: i32) -> (i32, i32) {
    %c0_i32 = arith.constant 0 : i32
    %c0_i32_0 = arith.constant 0 : i32
    return %arg0, %c0_i32 : i32, i32
  }
  func.func @transform_2(%arg0: i32) -> (i32, i32) {
    %c0_i32 = arith.constant 0 : i32
    %c0_i32_0 = arith.constant 0 : i32
    return %arg0, %c0_i32 : i32, i32
  }
  func.func @transform_3(%arg0: i32) -> (i32, i32) {
    %c0_i32 = arith.constant 0 : i32
    %c0_i32_0 = arith.constant 0 : i32
    return %arg0, %c0_i32 : i32, i32
  }
  func.func @transform_4(%arg0: i32) -> (i32, i32) {
    %c0_i32 = arith.constant 0 : i32
    %c0_i32_0 = arith.constant 0 : i32
    return %arg0, %c0_i32 : i32, i32
  }
  func.func @transform_5(%arg0: i32) -> (i32, i32) {
    %c0_i32 = arith.constant 0 : i32
    %c0_i32_0 = arith.constant 0 : i32
    %c0_i32_1 = arith.constant 0 : i32
    return %c0_i32, %c0_i32_0 : i32, i32
  }
  func.func @transform_6(%arg0: i32) -> (i32, i32) {
    %c0_i32 = arith.constant 0 : i32
    %c0_i32_0 = arith.constant 0 : i32
    %c0_i32_1 = arith.constant 0 : i32
    return %c0_i32, %c0_i32_0 : i32, i32
  }
  func.func @transform_7(%arg0: i32) -> (i32, i32) {
    %c0_i32 = arith.constant 0 : i32
    %c0_i32_0 = arith.constant 0 : i32
    return %arg0, %c0_i32 : i32, i32
  }
  func.func @transform_8(%arg0: i32) -> (i32, i32) {
    %c0_i32 = arith.constant 0 : i32
    %c0_i32_0 = arith.constant 0 : i32
    return %arg0, %c0_i32 : i32, i32
  }
}

</mosaic_0001>

<llo_original>
// kernel: tpu_custom_call.1
$region0: #{tpu_custom_call.1}
  #allocation0 [shape = 'u32[]', space=smem, size = 0x4, offset = 0x4, fixed_abs, tag = 'smem constant byte address 0x4 - core index']
  #allocation1 [shape = 'u32[144,128]{1,0:T(1,128)}', space=vmem, size = 0x12000, scoped, tag = 'internal scratch']
  %s0 = inlined_call_operand.hbm [shape: bf16[16,128], index: 0, kind: input, shape index: {}]
  %s1 = inlined_call_operand.hbm [shape: bf16[16,128], index: 1, kind: input, shape index: {}]
  %s2 = inlined_call_operand.hbm [shape: bf16[16,128], index: 2, kind: input, shape index: {}]
  %s3 = inlined_call_operand.hbm [shape: f32[16,128], index: 3, kind: input, shape index: {}]
  %s4 = inlined_call_operand.hbm [shape: f32[16,128], index: 4, kind: input, shape index: {}]
  %s5 = inlined_call_operand.hbm [shape: bf16[384,640], index: 5, kind: input, shape index: {}]
  %s6 = inlined_call_operand.vmem [shape: f32[1,640], index: 6, kind: input, shape index: {}]
  %s7 = inlined_call_operand.hbm [shape: f32[16,128], index: 7, kind: output, shape index: {0}]
  %s8 = inlined_call_operand.hbm [shape: f32[16,128], index: 8, kind: output, shape index: {1}]
  %9 = xla_tuple %s7, %s8
  %s10 = sld [smem:[#allocation0]]
  $region70: #{tpu_custom_call.1} parent=0
    _
  %s12 = ssub.s32 1, %s10
  %s13 = scalar_select 0, %s12, %s10
  $region1: #{tpu_custom_call.1} parent=0
    #allocation2 [shape = 'u8[4096]{0}', space=vmem, size = 0x1000, scoped, tag = 'input window, operand 0, single buffered']
    #allocation3 [shape = 's32[1]{0}', space=sflag, size = 0x4, scoped, tag = 'scoped memory for tpu_custom_call.1']
    #allocation4 [shape = 's32[1]{0}', space=sflag, size = 0x4, scoped, tag = 'scoped memory for tpu_custom_call.1']
    #allocation5 [shape = 'u8[4096]{0}', space=vmem, size = 0x1000, scoped, tag = 'input window, operand 1, single buffered']
    #allocation6 [shape = 's32[1]{0}', space=sflag, size = 0x4, scoped, tag = 'scoped memory for tpu_custom_call.1']
    #allocation7 [shape = 'u8[4096]{0}', space=vmem, size = 0x1000, scoped, tag = 'input window, operand 2, single buffered']
    #allocation8 [shape = 'u8[8192]{0}', space=vmem, size = 0x2000, scoped, tag = 'input window, operand 3, single buffered']
    #allocation9 [shape = 's32[1]{0}', space=sflag, size = 0x4, scoped, tag = 'scoped memory for tpu_custom_call.1']
    #allocation10 [shape = 'u8[8192]{0}', space=vmem, size = 0x2000, scoped, tag = 'input window, operand 4, single buffered']
    #allocation11 [shape = 'u8[491520]{0}', space=vmem, size = 0x78000, scoped, tag = 'input window, operand 5, single buffered']
    #allocation12 [shape = 's32[1]{0}', space=sflag, size = 0x4, scoped, tag = 'scoped memory for tpu_custom_call.1']
    #allocation13 [shape = 'u8[8192]{0}', space=vmem, size = 0x2000, scoped, tag = 'output window, operand 0, single buffered']
    #allocation14 [shape = 'u8[8192]{0}', space=vmem, size = 0x2000, scoped, tag = 'output window, operand 1, single buffered']
    #allocation15 [shape = 's32[1]{0}', space=sflag, size = 0x4, scoped, tag = 'scoped memory for tpu_custom_call.1']
    %14 = vsyncpa [#allocation3], 0
    %15 = vsyncpa [#allocation6], 0
    %16 = vsyncpa [#allocation9], 0
    %17 = vsyncpa [#allocation12], 0
    %18 = vsyncpa [#allocation4], 0
    %19 = vsyncpa [#allocation15], 0
    // Predicated region
    $region2: #{tpu_custom_call.1} parent=1 // pred_check
      _
    $region3: #{tpu_custom_call.1} parent=1 // pred_check_branch
      %21 = sbr.rel (0) target = $region5
    $region4: #{tpu_custom_call.1} parent=1 // pred_region
      %s23 = ssub.s32 128, 128
      %24 = vsyncadd [#allocation3], %s23
      %s25 = sshll.u32 [#allocation2], 4
      %s26 = int_to_ptr.vmem [resolvable:$true] %s25
      %31 = dma.hbm_to_vmem [thread:$0]  %s0, 128, %s26, [#allocation3], 64, 64, 4
    $region5: #{tpu_custom_call.1} parent=1 // pred_fallthru
      _
    // Predicated region
    $region6: #{tpu_custom_call.1} parent=1 // pred_check
      _
    $region7: #{tpu_custom_call.1} parent=1 // pred_check_branch
      %33 = sbr.rel (0) target = $region9
    $region8: #{tpu_custom_call.1} parent=1 // pred_region
      %s35 = ssub.s32 128, 128
      %36 = vsyncadd [#allocation6], %s35
      %s37 = sshll.u32 [#allocation5], 4
      %s38 = int_to_ptr.vmem [resolvable:$true] %s37
      %43 = dma.hbm_to_vmem [thread:$0]  %s1, 128, %s38, [#allocation6], 64, 64, 4
    $region9: #{tpu_custom_call.1} parent=1 // pred_fallthru
      _
    // Predicated region
    $region10: #{tpu_custom_call.1} parent=1 // pred_check
      _
    $region11: #{tpu_custom_call.1} parent=1 // pred_check_branch
      %45 = sbr.rel (0) target = $region13
    $region12: #{tpu_custom_call.1} parent=1 // pred_region
      %s47 = ssub.s32 128, 128
      %48 = vsyncadd [#allocation6], %s47
      %s49 = sshll.u32 [#allocation7], 4
      %s50 = int_to_ptr.vmem [resolvable:$true] %s49
      %55 = dma.hbm_to_vmem [thread:$0]  %s2, 128, %s50, [#allocation6], 64, 64, 4
    $region13: #{tpu_custom_call.1} parent=1 // pred_fallthru
      _
    // Predicated region
    $region14: #{tpu_custom_call.1} parent=1 // pred_check
      _
    $region15: #{tpu_custom_call.1} parent=1 // pred_check_branch
      %57 = sbr.rel (0) target = $region17
    $region16: #{tpu_custom_call.1} parent=1 // pred_region
      %s59 = ssub.s32 256, 256
      %60 = vsyncadd [#allocation9], %s59
      %s61 = sshll.u32 [#allocation8], 4
      %s62 = int_to_ptr.vmem [resolvable:$true] %s61
      %67 = dma.hbm_to_vmem [thread:$0]  %s3, 256, %s62, [#allocation9], 128, 128, 8
    $region17: #{tpu_custom_call.1} parent=1 // pred_fallthru
      _
    // Predicated region
    $region18: #{tpu_custom_call.1} parent=1 // pred_check
      _
    $region19: #{tpu_custom_call.1} parent=1 // pred_check_branch
      %69 = sbr.rel (0) target = $region21
    $region20: #{tpu_custom_call.1} parent=1 // pred_region
      %s71 = ssub.s32 256, 256
      %72 = vsyncadd [#allocation9], %s71
      %s73 = sshll.u32 [#allocation10], 4
      %s74 = int_to_ptr.vmem [resolvable:$true] %s73
      %79 = dma.hbm_to_vmem [thread:$0]  %s4, 256, %s74, [#allocation9], 128, 128, 8
    $region21: #{tpu_custom_call.1} parent=1 // pred_fallthru
      _
    // Predicated region
    $region22: #{tpu_custom_call.1} parent=1 // pred_check
      _
    $region23: #{tpu_custom_call.1} parent=1 // pred_check_branch
      %81 = sbr.rel (0) target = $region25
    $region24: #{tpu_custom_call.1} parent=1 // pred_region
      %s83 = ssub.s32 15360, 15360
      %84 = vsyncadd [#allocation12], %s83
      %s85 = sshll.u32 [#allocation11], 4
      %s86 = int_to_ptr.vmem [resolvable:$true] %s85
      %91 = dma.hbm_to_vmem [thread:$0]  %s5, 15360, %s86, [#allocation12], 320, 320, 20
    $region25: #{tpu_custom_call.1} parent=1 // pred_fallthru
      _
    // Predicated region
    $region26: #{tpu_custom_call.1} parent=1 // pred_check
      _
    $region27: #{tpu_custom_call.1} parent=1 // pred_check_branch
      %93 = sbr.rel (0) target = $region29
    $region28: #{tpu_custom_call.1} parent=1 // pred_region
      _
    $region29: #{tpu_custom_call.1} parent=1 // pred_fallthru
      _
    // Predicated region
    $region30: #{tpu_custom_call.1} parent=1 // pred_check
      _
    $region31: #{tpu_custom_call.1} parent=1 // pred_check_branch
      %95 = sbr.rel (0) target = $region33
    $region32: #{tpu_custom_call.1} parent=1 // pred_region
      %96 = dma.done [#allocation3], 128
    $region33: #{tpu_custom_call.1} parent=1 // pred_fallthru
      _
    // Predicated region
    $region34: #{tpu_custom_call.1} parent=1 // pred_check
      _
    $region35: #{tpu_custom_call.1} parent=1 // pred_check_branch
      %98 = sbr.rel (0) target = $region37
    $region36: #{tpu_custom_call.1} parent=1 // pred_region
      %99 = dma.done [#allocation6], 128
    $region37: #{tpu_custom_call.1} parent=1 // pred_fallthru
      _
    // Predicated region
    $region38: #{tpu_custom_call.1} parent=1 // pred_check
      _
    $region39: #{tpu_custom_call.1} parent=1 // pred_check_branch
      %101 = sbr.rel (0) target = $region41
    $region40: #{tpu_custom_call.1} parent=1 // pred_region
      %102 = dma.done [#allocation6], 128
    $region41: #{tpu_custom_call.1} parent=1 // pred_fallthru
      _
    // Predicated region
    $region42: #{tpu_custom_call.1} parent=1 // pred_check
      _
    $region43: #{tpu_custom_call.1} parent=1 // pred_check_branch
      %104 = sbr.rel (0) target = $region45
    $region44: #{tpu_custom_call.1} parent=1 // pred_region
      %105 = dma.done [#allocation9], 256
    $region45: #{tpu_custom_call.1} parent=1 // pred_fallthru
      _
    // Predicated region
    $region46: #{tpu_custom_call.1} parent=1 // pred_check
      _
    $region47: #{tpu_custom_call.1} parent=1 // pred_check_branch
      %107 = sbr.rel (0) target = $region49
    $region48: #{tpu_custom_call.1} parent=1 // pred_region
      %108 = dma.done [#allocation9], 256
    $region49: #{tpu_custom_call.1} parent=1 // pred_fallthru
      _
    // Predicated region
    $region50: #{tpu_custom_call.1} parent=1 // pred_check
      _
    $region51: #{tpu_custom_call.1} parent=1 // pred_check_branch
      %110 = sbr.rel (0) target = $region53
    $region52: #{tpu_custom_call.1} parent=1 // pred_region
      %111 = dma.done [#allocation12], 15360
    $region53: #{tpu_custom_call.1} parent=1 // pred_fallthru
      _
    %v113 = vld [vmem:[#allocation2] sm:$0xf]
    %v114 = vld [vmem:[#allocation2 + $0x4] sm:$0xf]
    %v115 = vld [vmem:[#allocation11] sm:$0xff]
    %v116 = vld [vmem:[#allocation11 + $0x8] sm:$0xff]
    %v117 = vld [vmem:[#allocation11 + $0x10] sm:$0xf]
    %v118 = vld [vmem:[#allocation11 + $0x14] sm:$0xff]
    %v119 = vld [vmem:[#allocation11 + $0x1c] sm:$0xff]
    %v120 = vld [vmem:[#allocation11 + $0x24] sm:$0xf]
    %v121 = vld [vmem:[#allocation11 + $0x28] sm:$0xff]
    %v122 = vld [vmem:[#allocation11 + $0x30] sm:$0xff]
    %v123 = vld [vmem:[#allocation11 + $0x38] sm:$0xf]
    %v124 = vld [vmem:[#allocation11 + $0x3c] sm:$0xff]
    %v125 = vld [vmem:[#allocation11 + $0x44] sm:$0xff]
    %v126 = vld [vmem:[#allocation11 + $0x4c] sm:$0xf]
    %v127 = vld [vmem:[#allocation11 + $0x50] sm:$0xff]
    %v128 = vld [vmem:[#allocation11 + $0x58] sm:$0xff]
    %v129 = vld [vmem:[#allocation11 + $0x60] sm:$0xf]
    %v130 = vld [vmem:[#allocation11 + $0x64] sm:$0xff]
    %v131 = vld [vmem:[#allocation11 + $0x6c] sm:$0xff]
    %v132 = vld [vmem:[#allocation11 + $0x74] sm:$0xf]
    %v133 = vld [vmem:[#allocation11 + $0x78] sm:$0xff]
    %v134 = vld [vmem:[#allocation11 + $0x80] sm:$0xff]
    %v135 = vld [vmem:[#allocation11 + $0x88] sm:$0xf]
    %v136 = vld [vmem:[#allocation11 + $0x8c] sm:$0xff]
    %v137 = vld [vmem:[#allocation11 + $0x94] sm:$0xff]
    %v138 = vld [vmem:[#allocation11 + $0x9c] sm:$0xf]
    %v139 = vld [vmem:[#allocation11 + $0xa0] sm:$0xff]
    %v140 = vld [vmem:[#allocation11 + $0xa8] sm:$0xff]
    %v141 = vld [vmem:[#allocation11 + $0xb0] sm:$0xf]
    %v142 = vld [vmem:[#allocation11 + $0xb4] sm:$0xff]
    %v143 = vld [vmem:[#allocation11 + $0xbc] sm:$0xff]
    %v144 = vld [vmem:[#allocation11 + $0xc4] sm:$0xf]
    %v145 = vld [vmem:[#allocation11 + $0xc8] sm:$0xff]
    %v146 = vld [vmem:[#allocation11 + $0xd0] sm:$0xff]
    %v147 = vld [vmem:[#allocation11 + $0xd8] sm:$0xf]
    %v148 = vld [vmem:[#allocation11 + $0xdc] sm:$0xff]
    %v149 = vld [vmem:[#allocation11 + $0xe4] sm:$0xff]
    %v150 = vld [vmem:[#allocation11 + $0xec] sm:$0xf]
    %v151 = vld [vmem:[#allocation11 + $0xf0] sm:$0xff]
    %v152 = vld [vmem:[#allocation11 + $0xf8] sm:$0xff]
    %v153 = vld [vmem:[#allocation11 + $0x100] sm:$0xf]
    %v154 = vld [vmem:[#allocation11 + $0x104] sm:$0xff]
    %v155 = vld [vmem:[#allocation11 + $0x10c] sm:$0xff]
    %v156 = vld [vmem:[#allocation11 + $0x114] sm:$0xf]
    %v157 = vld [vmem:[#allocation11 + $0x118] sm:$0xff]
    %v158 = vld [vmem:[#allocation11 + $0x120] sm:$0xff]
    %v159 = vld [vmem:[#allocation11 + $0x128] sm:$0xf]
    %v160 = vld [vmem:[#allocation11 + $0x12c] sm:$0xff]
    %v161 = vld [vmem:[#allocation11 + $0x134] sm:$0xff]
    %v162 = vld [vmem:[#allocation11 + $0x13c] sm:$0xf]
    %v163 = vld [vmem:[#allocation5] sm:$0xf]
    %v164 = vld [vmem:[#allocation5 + $0x4] sm:$0xf]
    %v165 = vld [vmem:[#allocation11 + $0x140] sm:$0xff]
    %v166 = vld [vmem:[#allocation11 + $0x148] sm:$0xff]
    %v167 = vld [vmem:[#allocation11 + $0x150] sm:$0xf]
    %v168 = vld [vmem:[#allocation11 + $0x154] sm:$0xff]
    %v169 = vld [vmem:[#allocation11 + $0x15c] sm:$0xff]
    %v170 = vld [vmem:[#allocation11 + $0x164] sm:$0xf]
    %v171 = vld [vmem:[#allocation11 + $0x168] sm:$0xff]
    %v172 = vld [vmem:[#allocation11 + $0x170] sm:$0xff]
    %v173 = vld [vmem:[#allocation11 + $0x178] sm:$0xf]
    %v174 = vld [vmem:[#allocation11 + $0x17c] sm:$0xff]
    %v175 = vld [vmem:[#allocation11 + $0x184] sm:$0xff]
    %v176 = vld [vmem:[#allocation11 + $0x18c] sm:$0xf]
    %v177 = vld [vmem:[#allocation11 + $0x190] sm:$0xff]
    %v178 = vld [vmem:[#allocation11 + $0x198] sm:$0xff]
    %v179 = vld [vmem:[#allocation11 + $0x1a0] sm:$0xf]
    %v180 = vld [vmem:[#allocation11 + $0x1a4] sm:$0xff]
    %v181 = vld [vmem:[#allocation11 + $0x1ac] sm:$0xff]
    %v182 = vld [vmem:[#allocation11 + $0x1b4] sm:$0xf]
    %v183 = vld [vmem:[#allocation11 + $0x1b8] sm:$0xff]
    %v184 = vld [vmem:[#allocation11 + $0x1c0] sm:$0xff]
    %v185 = vld [vmem:[#allocation11 + $0x1c8] sm:$0xf]
    %v186 = vld [vmem:[#allocation11 + $0x1cc] sm:$0xff]
    %v187 = vld [vmem:[#allocation11 + $0x1d4] sm:$0xff]
    %v188 = vld [vmem:[#allocation11 + $0x1dc] sm:$0xf]
    %v189 = vld [vmem:[#allocation11 + $0x1e0] sm:$0xff]
    %v190 = vld [vmem:[#allocation11 + $0x1e8] sm:$0xff]
    %v191 = vld [vmem:[#allocation11 + $0x1f0] sm:$0xf]
    %v192 = vld [vmem:[#allocation11 + $0x1f4] sm:$0xff]
    %v193 = vld [vmem:[#allocation11 + $0x1fc] sm:$0xff]
    %v194 = vld [vmem:[#allocation11 + $0x204] sm:$0xf]
    %v195 = vld [vmem:[#allocation11 + $0x208] sm:$0xff]
    %v196 = vld [vmem:[#allocation11 + $0x210] sm:$0xff]
    %v197 = vld [vmem:[#allocation11 + $0x218] sm:$0xf]
    %v198 = vld [vmem:[#allocation11 + $0x21c] sm:$0xff]
    %v199 = vld [vmem:[#allocation11 + $0x224] sm:$0xff]
    %v200 = vld [vmem:[#allocation11 + $0x22c] sm:$0xf]
    %v201 = vld [vmem:[#allocation11 + $0x230] sm:$0xff]
    %v202 = vld [vmem:[#allocation11 + $0x238] sm:$0xff]
    %v203 = vld [vmem:[#allocation11 + $0x240] sm:$0xf]
    %v204 = vld [vmem:[#allocation11 + $0x244] sm:$0xff]
    %v205 = vld [vmem:[#allocation11 + $0x24c] sm:$0xff]
    %v206 = vld [vmem:[#allocation11 + $0x254] sm:$0xf]
    %v207 = vld [vmem:[#allocation11 + $0x258] sm:$0xff]
    %v208 = vld [vmem:[#allocation11 + $0x260] sm:$0xff]
    %v209 = vld [vmem:[#allocation11 + $0x268] sm:$0xf]
    %v210 = vld [vmem:[#allocation11 + $0x26c] sm:$0xff]
    %v211 = vld [vmem:[#allocation11 + $0x274] sm:$0xff]
    %v212 = vld [vmem:[#allocation11 + $0x27c] sm:$0xf]
    %v215 = vunpack.c.l.b16 %v163
    %v216 = vunpack.c.l.b16 %v164
    %v217 = vpack.c.b16 %v216, %v215
    %v267 = vunpack.c.l.b16 %v165
    %v268 = vunpack.c.h.b16 %v165
    %v269 = vunpack.c.l.b16 %v166
    %v270 = vunpack.c.h.b16 %v166
    %v271 = vunpack.c.l.b16 %v167
    %v272 = vunpack.c.l.b16 %v168
    %v273 = vunpack.c.h.b16 %v168
    %v274 = vunpack.c.l.b16 %v169
    %v275 = vunpack.c.h.b16 %v169
    %v276 = vunpack.c.l.b16 %v170
    %v277 = vunpack.c.l.b16 %v171
    %v278 = vunpack.c.h.b16 %v171
    %v279 = vunpack.c.l.b16 %v172
    %v280 = vunpack.c.h.b16 %v172
    %v281 = vunpack.c.l.b16 %v173
    %v282 = vunpack.c.l.b16 %v174
    %v283 = vunpack.c.h.b16 %v174
    %v284 = vunpack.c.l.b16 %v175
    %v285 = vunpack.c.h.b16 %v175
    %v286 = vunpack.c.l.b16 %v176
    %v287 = vunpack.c.l.b16 %v177
    %v288 = vunpack.c.h.b16 %v177
    %v289 = vunpack.c.l.b16 %v178
    %v290 = vunpack.c.h.b16 %v178
    %v291 = vunpack.c.l.b16 %v179
    %v292 = vunpack.c.l.b16 %v180
    %v293 = vunpack.c.h.b16 %v180
    %v294 = vunpack.c.l.b16 %v181
    %v295 = vunpack.c.h.b16 %v181
    %v296 = vunpack.c.l.b16 %v182
    %v297 = vunpack.c.l.b16 %v183
    %v298 = vunpack.c.h.b16 %v183
    %v299 = vunpack.c.l.b16 %v184
    %v300 = vunpack.c.h.b16 %v184
    %v301 = vunpack.c.l.b16 %v185
    %v302 = vunpack.c.l.b16 %v186
    %v303 = vunpack.c.h.b16 %v186
    %v304 = vunpack.c.l.b16 %v187
    %v305 = vunpack.c.h.b16 %v187
    %v306 = vunpack.c.l.b16 %v188
    %v307 = vunpack.c.l.b16 %v189
    %v308 = vunpack.c.h.b16 %v189
    %v309 = vunpack.c.l.b16 %v190
    %v310 = vunpack.c.h.b16 %v190
    %v311 = vunpack.c.l.b16 %v191
    %v312 = vunpack.c.l.b16 %v192
    %v313 = vunpack.c.h.b16 %v192
    %v314 = vunpack.c.l.b16 %v193
    %v315 = vunpack.c.h.b16 %v193
    %v316 = vunpack.c.l.b16 %v194
    %v317 = vunpack.c.l.b16 %v195
    %v318 = vunpack.c.h.b16 %v195
    %v319 = vunpack.c.l.b16 %v196
    %v320 = vunpack.c.h.b16 %v196
    %v321 = vunpack.c.l.b16 %v197
    %v322 = vunpack.c.l.b16 %v198
    %v323 = vunpack.c.h.b16 %v198
    %v324 = vunpack.c.l.b16 %v199
    %v325 = vunpack.c.h.b16 %v199
    %v326 = vunpack.c.l.b16 %v200
    %v327 = vunpack.c.l.b16 %v201
    %v328 = vunpack.c.h.b16 %v201
    %v329 = vunpack.c.l.b16 %v202
    %v330 = vunpack.c.h.b16 %v202
    %v331 = vunpack.c.l.b16 %v203
    %v332 = vunpack.c.l.b16 %v204
    %v333 = vunpack.c.h.b16 %v204
    %v334 = vunpack.c.l.b16 %v205
    %v335 = vunpack.c.h.b16 %v205
    %v336 = vunpack.c.l.b16 %v206
    %v337 = vunpack.c.l.b16 %v207
    %v338 = vunpack.c.h.b16 %v207
    %v339 = vunpack.c.l.b16 %v208
    %v340 = vunpack.c.h.b16 %v208
    %v341 = vunpack.c.l.b16 %v209
    %v342 = vunpack.c.l.b16 %v210
    %v343 = vunpack.c.h.b16 %v210
    %v344 = vunpack.c.l.b16 %v211
    %v345 = vunpack.c.h.b16 %v211
    %v346 = vunpack.c.l.b16 %v212
    %v347 = vpack.c.b16 %v272, %v267
    %v348 = vpack.c.b16 %v273, %v268
    %v349 = vpack.c.b16 %v274, %v269
    %v350 = vpack.c.b16 %v275, %v270
    %v351 = vpack.c.b16 %v276, %v271
    %v352 = vpack.c.b16 %v282, %v277
    %v353 = vpack.c.b16 %v283, %v278
    %v354 = vpack.c.b16 %v284, %v279
    %v355 = vpack.c.b16 %v285, %v280
    %v356 = vpack.c.b16 %v286, %v281
    %v357 = vpack.c.b16 %v292, %v287
    %v358 = vpack.c.b16 %v293, %v288
    %v359 = vpack.c.b16 %v294, %v289
    %v360 = vpack.c.b16 %v295, %v290
    %v361 = vpack.c.b16 %v296, %v291
    %v362 = vpack.c.b16 %v302, %v297
    %v363 = vpack.c.b16 %v303, %v298
    %v364 = vpack.c.b16 %v304, %v299
    %v365 = vpack.c.b16 %v305, %v300
    %v366 = vpack.c.b16 %v306, %v301
    %v367 = vpack.c.b16 %v312, %v307
    %v368 = vpack.c.b16 %v313, %v308
    %v369 = vpack.c.b16 %v314, %v309
    %v370 = vpack.c.b16 %v315, %v310
    %v371 = vpack.c.b16 %v316, %v311
    %v372 = vpack.c.b16 %v322, %v317
    %v373 = vpack.c.b16 %v323, %v318
    %v374 = vpack.c.b16 %v324, %v319
    %v375 = vpack.c.b16 %v325, %v320
    %v376 = vpack.c.b16 %v326, %v321
    %v377 = vpack.c.b16 %v332, %v327
    %v378 = vpack.c.b16 %v333, %v328
    %v379 = vpack.c.b16 %v334, %v329
    %v380 = vpack.c.b16 %v335, %v330
    %v381 = vpack.c.b16 %v336, %v331
    %v382 = vpack.c.b16 %v342, %v337
    %v383 = vpack.c.b16 %v343, %v338
    %v384 = vpack.c.b16 %v344, %v339
    %v385 = vpack.c.b16 %v345, %v340
    %v386 = vpack.c.b16 %v346, %v341
    %427 = vmatprep.subr.bf16.mxu0 %v348
    %428 = vmatpush1.bf16.msra.mxu0 %v347
    %429 = vmatprep.subr.bf16.mxu0 %v353
    %430 = vmatpush1.bf16.msra.mxu0 %v352
    %431 = vmatprep.subr.bf16.mxu0 %v358
    %432 = vmatpush1.bf16.msra.mxu0 %v357
    %433 = vmatprep.subr.bf16.mxu0 %v363
    %434 = vmatpush1.bf16.msra.mxu0 %v362
    %435 = vmatprep.subr.bf16.mxu0 %v368
    %436 = vmatpush1.bf16.msra.mxu0 %v367
    %437 = vmatprep.subr.bf16.mxu0 %v373
    %438 = vmatpush1.bf16.msra.mxu0 %v372
    %439 = vmatprep.subr.bf16.mxu0 %v378
    %440 = vmatpush1.bf16.msra.mxu0 %v377
    %441 = vmatprep.subr.bf16.mxu0 %v383
    %442 = vmatpush1.bf16.msra.mxu0 %v382
    %443 = vmatprep.subr.bf16.mxu0 0
    %444 = vmatpush1.bf16.msra.mxu0 0
    %445 = vmatprep.subr.bf16.mxu0 0
    %446 = vmatpush1.bf16.msra.mxu0 0
    %447 = vmatprep.subr.bf16.mxu0 0
    %448 = vmatpush1.bf16.msra.mxu0 0
    %449 = vmatprep.subr.bf16.mxu0 0
    %450 = vmatpush1.bf16.msra.mxu0 0
    %451 = vmatprep.subr.bf16.mxu0 0
    %452 = vmatpush1.bf16.msra.mxu0 0
    %453 = vmatprep.subr.bf16.mxu0 0
    %454 = vmatpush1.bf16.msra.mxu0 0
    %455 = vmatprep.subr.bf16.mxu0 0
    %456 = vmatpush1.bf16.msra.mxu0 0
    %457 = vmatprep.subr.bf16.mxu0 0
    %458 = vmatpush1.bf16.msra.mxu0 0
    %459 = vmatprep.mubr.bf16.mxu0 0
    %460 = vmatmul.mubr.bf16.gmra.mrb[0].mxu0 %v217
    %v461 = vpop.f32.mrb[0].mxu0
    %v462 = vadd.f32 0.0, %v461
    %v463 = vpop.f32.mrb[0].mxu0
    %v464 = vadd.f32 0.0, %v463
    %v465 = vpop.f32.mrb[0].mxu0
    %v466 = vadd.f32 0.0, %v465
    %v467 = vpop.f32.mrb[0].mxu0
    %v468 = vadd.f32 0.0, %v467
    %469 = vdwg.mxu0
    %470 = vmatprep.subr.bf16.mxu0 %v350
    %471 = vmatpush1.bf16.msra.mxu0 %v349
    %472 = vmatprep.subr.bf16.mxu0 %v355
    %473 = vmatpush1.bf16.msra.mxu0 %v354
    %474 = vmatprep.subr.bf16.mxu0 %v360
    %475 = vmatpush1.bf16.msra.mxu0 %v359
    %476 = vmatprep.subr.bf16.mxu0 %v365
    %477 = vmatpush1.bf16.msra.mxu0 %v364
    %478 = vmatprep.subr.bf16.mxu0 %v370
    %479 = vmatpush1.bf16.msra.mxu0 %v369
    %480 = vmatprep.subr.bf16.mxu0 %v375
    %481 = vmatpush1.bf16.msra.mxu0 %v374
    %482 = vmatprep.subr.bf16.mxu0 %v380
    %483 = vmatpush1.bf16.msra.mxu0 %v379
    %484 = vmatprep.subr.bf16.mxu0 %v385
    %485 = vmatpush1.bf16.msra.mxu0 %v384
    %486 = vmatprep.subr.bf16.mxu0 0
    %487 = vmatpush1.bf16.msra.mxu0 0
    %488 = vmatprep.subr.bf16.mxu0 0
    %489 = vmatpush1.bf16.msra.mxu0 0
    %490 = vmatprep.subr.bf16.mxu0 0
    %491 = vmatpush1.bf16.msra.mxu0 0
    %492 = vmatprep.subr.bf16.mxu0 0
    %493 = vmatpush1.bf16.msra.mxu0 0
    %494 = vmatprep.subr.bf16.mxu0 0
    %495 = vmatpush1.bf16.msra.mxu0 0
    %496 = vmatprep.subr.bf16.mxu0 0
    %497 = vmatpush1.bf16.msra.mxu0 0
    %498 = vmatprep.subr.bf16.mxu0 0
    %499 = vmatpush1.bf16.msra.mxu0 0
    %500 = vmatprep.subr.bf16.mxu0 0
    %501 = vmatpush1.bf16.msra.mxu0 0
    %502 = vmatprep.mubr.bf16.mxu0 0
    %503 = vmatmul.mubr.bf16.gmra.mrb[0].mxu0 %v217
    %v504 = vpop.f32.mrb[0].mxu0
    %v505 = vadd.f32 0.0, %v504
    %v506 = vpop.f32.mrb[0].mxu0
    %v507 = vadd.f32 0.0, %v506
    %v508 = vpop.f32.mrb[0].mxu0
    %v509 = vadd.f32 0.0, %v508
    %v510 = vpop.f32.mrb[0].mxu0
    %v511 = vadd.f32 0.0, %v510
    %512 = vdwg.mxu0
    %513 = vmatprep.subr.bf16.mxu0 0
    %514 = vmatpush1.bf16.msra.mxu0 %v351
    %515 = vmatprep.subr.bf16.mxu0 0
    %516 = vmatpush1.bf16.msra.mxu0 %v356
    %517 = vmatprep.subr.bf16.mxu0 0
    %518 = vmatpush1.bf16.msra.mxu0 %v361
    %519 = vmatprep.subr.bf16.mxu0 0
    %520 = vmatpush1.bf16.msra.mxu0 %v366
    %521 = vmatprep.subr.bf16.mxu0 0
    %522 = vmatpush1.bf16.msra.mxu0 %v371
    %523 = vmatprep.subr.bf16.mxu0 0
    %524 = vmatpush1.bf16.msra.mxu0 %v376
    %525 = vmatprep.subr.bf16.mxu0 0
    %526 = vmatpush1.bf16.msra.mxu0 %v381
    %527 = vmatprep.subr.bf16.mxu0 0
    %528 = vmatpush1.bf16.msra.mxu0 %v386
    %529 = vmatprep.subr.bf16.mxu0 0
    %530 = vmatpush1.bf16.msra.mxu0 0
    %531 = vmatprep.subr.bf16.mxu0 0
    %532 = vmatpush1.bf16.msra.mxu0 0
    %533 = vmatprep.subr.bf16.mxu0 0
    %534 = vmatpush1.bf16.msra.mxu0 0
    %535 = vmatprep.subr.bf16.mxu0 0
    %536 = vmatpush1.bf16.msra.mxu0 0
    %537 = vmatprep.subr.bf16.mxu0 0
    %538 = vmatpush1.bf16.msra.mxu0 0
    %539 = vmatprep.subr.bf16.mxu0 0
    %540 = vmatpush1.bf16.msra.mxu0 0
    %541 = vmatprep.subr.bf16.mxu0 0
    %542 = vmatpush1.bf16.msra.mxu0 0
    %543 = vmatprep.subr.bf16.mxu0 0
    %544 = vmatpush1.bf16.msra.mxu0 0
    %545 = vmatprep.mubr.bf16.mxu0 0
    %546 = vmatmul.mubr.bf16.gmra.mrb[0].mxu0 %v217
    %v547 = vpop.f32.mrb[0].mxu0
    %v548 = vadd.f32 0.0, %v547
    %v549 = vpop.f32.mrb[0].mxu0
    %v550 = vpop.f32.mrb[0].mxu0
    %v551 = vadd.f32 0.0, %v550
    %v552 = vpop.f32.mrb[0].mxu0
    %553 = vdwg.mxu0
    %v556 = vunpack.c.l.b16 %v113
    %v557 = vunpack.c.l.b16 %v114
    %v558 = vpack.c.b16 %v557, %v556
    %v608 = vunpack.c.l.b16 %v115
    %v609 = vunpack.c.h.b16 %v115
    %v610 = vunpack.c.l.b16 %v116
    %v611 = vunpack.c.h.b16 %v116
    %v612 = vunpack.c.l.b16 %v117
    %v613 = vunpack.c.l.b16 %v118
    %v614 = vunpack.c.h.b16 %v118
    %v615 = vunpack.c.l.b16 %v119
    %v616 = vunpack.c.h.b16 %v119
    %v617 = vunpack.c.l.b16 %v120
    %v618 = vunpack.c.l.b16 %v121
    %v619 = vunpack.c.h.b16 %v121
    %v620 = vunpack.c.l.b16 %v122
    %v621 = vunpack.c.h.b16 %v122
    %v622 = vunpack.c.l.b16 %v123
    %v623 = vunpack.c.l.b16 %v124
    %v624 = vunpack.c.h.b16 %v124
    %v625 = vunpack.c.l.b16 %v125
    %v626 = vunpack.c.h.b16 %v125
    %v627 = vunpack.c.l.b16 %v126
    %v628 = vunpack.c.l.b16 %v127
    %v629 = vunpack.c.h.b16 %v127
    %v630 = vunpack.c.l.b16 %v128
    %v631 = vunpack.c.h.b16 %v128
    %v632 = vunpack.c.l.b16 %v129
    %v633 = vunpack.c.l.b16 %v130
    %v634 = vunpack.c.h.b16 %v130
    %v635 = vunpack.c.l.b16 %v131
    %v636 = vunpack.c.h.b16 %v131
    %v637 = vunpack.c.l.b16 %v132
    %v638 = vunpack.c.l.b16 %v133
    %v639 = vunpack.c.h.b16 %v133
    %v640 = vunpack.c.l.b16 %v134
    %v641 = vunpack.c.h.b16 %v134
    %v642 = vunpack.c.l.b16 %v135
    %v643 = vunpack.c.l.b16 %v136
    %v644 = vunpack.c.h.b16 %v136
    %v645 = vunpack.c.l.b16 %v137
    %v646 = vunpack.c.h.b16 %v137
    %v647 = vunpack.c.l.b16 %v138
    %v648 = vunpack.c.l.b16 %v139
    %v649 = vunpack.c.h.b16 %v139
    %v650 = vunpack.c.l.b16 %v140
    %v651 = vunpack.c.h.b16 %v140
    %v652 = vunpack.c.l.b16 %v141
    %v653 = vunpack.c.l.b16 %v142
    %v654 = vunpack.c.h.b16 %v142
    %v655 = vunpack.c.l.b16 %v143
    %v656 = vunpack.c.h.b16 %v143
    %v657 = vunpack.c.l.b16 %v144
    %v658 = vunpack.c.l.b16 %v145
    %v659 = vunpack.c.h.b16 %v145
    %v660 = vunpack.c.l.b16 %v146
    %v661 = vunpack.c.h.b16 %v146
    %v662 = vunpack.c.l.b16 %v147
    %v663 = vunpack.c.l.b16 %v148
    %v664 = vunpack.c.h.b16 %v148
    %v665 = vunpack.c.l.b16 %v149
    %v666 = vunpack.c.h.b16 %v149
    %v667 = vunpack.c.l.b16 %v150
    %v668 = vunpack.c.l.b16 %v151
    %v669 = vunpack.c.h.b16 %v151
    %v670 = vunpack.c.l.b16 %v152
    %v671 = vunpack.c.h.b16 %v152
    %v672 = vunpack.c.l.b16 %v153
    %v673 = vunpack.c.l.b16 %v154
    %v674 = vunpack.c.h.b16 %v154
    %v675 = vunpack.c.l.b16 %v155
    %v676 = vunpack.c.h.b16 %v155
    %v677 = vunpack.c.l.b16 %v156
    %v678 = vunpack.c.l.b16 %v157
    %v679 = vunpack.c.h.b16 %v157
    %v680 = vunpack.c.l.b16 %v158
    %v681 = vunpack.c.h.b16 %v158
    %v682 = vunpack.c.l.b16 %v159
    %v683 = vunpack.c.l.b16 %v160
    %v684 = vunpack.c.h.b16 %v160
    %v685 = vunpack.c.l.b16 %v161
    %v686 = vunpack.c.h.b16 %v161
    %v687 = vunpack.c.l.b16 %v162
    %v688 = vpack.c.b16 %v613, %v608
    %v689 = vpack.c.b16 %v614, %v609
    %v690 = vpack.c.b16 %v615, %v610
    %v691 = vpack.c.b16 %v616, %v611
    %v692 = vpack.c.b16 %v617, %v612
    %v693 = vpack.c.b16 %v623, %v618
    %v694 = vpack.c.b16 %v624, %v619
    %v695 = vpack.c.b16 %v625, %v620
    %v696 = vpack.c.b16 %v626, %v621
    %v697 = vpack.c.b16 %v627, %v622
    %v698 = vpack.c.b16 %v633, %v628
    %v699 = vpack.c.b16 %v634, %v629
    %v700 = vpack.c.b16 %v635, %v630
    %v701 = vpack.c.b16 %v636, %v631
    %v702 = vpack.c.b16 %v637, %v632
    %v703 = vpack.c.b16 %v643, %v638
    %v704 = vpack.c.b16 %v644, %v639
    %v705 = vpack.c.b16 %v645, %v640
    %v706 = vpack.c.b16 %v646, %v641
    %v707 = vpack.c.b16 %v647, %v642
    %v708 = vpack.c.b16 %v653, %v648
    %v709 = vpack.c.b16 %v654, %v649
    %v710 = vpack.c.b16 %v655, %v650
    %v711 = vpack.c.b16 %v656, %v651
    %v712 = vpack.c.b16 %v657, %v652
    %v713 = vpack.c.b16 %v663, %v658
    %v714 = vpack.c.b16 %v664, %v659
    %v715 = vpack.c.b16 %v665, %v660
    %v716 = vpack.c.b16 %v666, %v661
    %v717 = vpack.c.b16 %v667, %v662
    %v718 = vpack.c.b16 %v673, %v668
    %v719 = vpack.c.b16 %v674, %v669
    %v720 = vpack.c.b16 %v675, %v670
    %v721 = vpack.c.b16 %v676, %v671
    %v722 = vpack.c.b16 %v677, %v672
    %v723 = vpack.c.b16 %v683, %v678
    %v724 = vpack.c.b16 %v684, %v679
    %v725 = vpack.c.b16 %v685, %v680
    %v726 = vpack.c.b16 %v686, %v681
    %v727 = vpack.c.b16 %v687, %v682
    %768 = vmatprep.subr.bf16.mxu0 %v689
    %769 = vmatpush1.bf16.msra.mxu0 %v688
    %770 = vmatprep.subr.bf16.mxu0 %v694
    %771 = vmatpush1.bf16.msra.mxu0 %v693
    %772 = vmatprep.subr.bf16.mxu0 %v699
    %773 = vmatpush1.bf16.msra.mxu0 %v698
    %774 = vmatprep.subr.bf16.mxu0 %v704
    %775 = vmatpush1.bf16.msra.mxu0 %v703
    %776 = vmatprep.subr.bf16.mxu0 %v709
    %777 = vmatpush1.bf16.msra.mxu0 %v708
    %778 = vmatprep.subr.bf16.mxu0 %v714
    %779 = vmatpush1.bf16.msra.mxu0 %v713
    %780 = vmatprep.subr.bf16.mxu0 %v719
    %781 = vmatpush1.bf16.msra.mxu0 %v718
    %782 = vmatprep.subr.bf16.mxu0 %v724
    %783 = vmatpush1.bf16.msra.mxu0 %v723
    %784 = vmatprep.subr.bf16.mxu0 0
    %785 = vmatpush1.bf16.msra.mxu0 0
    %786 = vmatprep.subr.bf16.mxu0 0
    %787 = vmatpush1.bf16.msra.mxu0 0
    %788 = vmatprep.subr.bf16.mxu0 0
    %789 = vmatpush1.bf16.msra.mxu0 0
    %790 = vmatprep.subr.bf16.mxu0 0
    %791 = vmatpush1.bf16.msra.mxu0 0
    %792 = vmatprep.subr.bf16.mxu0 0
    %793 = vmatpush1.bf16.msra.mxu0 0
    %794 = vmatprep.subr.bf16.mxu0 0
    %795 = vmatpush1.bf16.msra.mxu0 0
    %796 = vmatprep.subr.bf16.mxu0 0
    %797 = vmatpush1.bf16.msra.mxu0 0
    %798 = vmatprep.subr.bf16.mxu0 0
    %799 = vmatpush1.bf16.msra.mxu0 0
    %800 = vmatprep.mubr.bf16.mxu0 0
    %801 = vmatmul.mubr.bf16.gmra.mrb[0].mxu0 %v558
    %v802 = vpop.f32.mrb[0].mxu0
    %v803 = vadd.f32 %v462, %v802
    %v804 = vpop.f32.mrb[0].mxu0
    %v805 = vadd.f32 %v464, %v804
    %v806 = vpop.f32.mrb[0].mxu0
    %v807 = vadd.f32 %v466, %v806
    %v808 = vpop.f32.mrb[0].mxu0
    %v809 = vadd.f32 %v468, %v808
    %810 = vdwg.mxu0
    %811 = vmatprep.subr.bf16.mxu0 %v691
    %812 = vmatpush1.bf16.msra.mxu0 %v690
    %813 = vmatprep.subr.bf16.mxu0 %v696
    %814 = vmatpush1.bf16.msra.mxu0 %v695
    %815 = vmatprep.subr.bf16.mxu0 %v701
    %816 = vmatpush1.bf16.msra.mxu0 %v700
    %817 = vmatprep.subr.bf16.mxu0 %v706
    %818 = vmatpush1.bf16.msra.mxu0 %v705
    %819 = vmatprep.subr.bf16.mxu0 %v711
    %820 = vmatpush1.bf16.msra.mxu0 %v710
    %821 = vmatprep.subr.bf16.mxu0 %v716
    %822 = vmatpush1.bf16.msra.mxu0 %v715
    %823 = vmatprep.subr.bf16.mxu0 %v721
    %824 = vmatpush1.bf16.msra.mxu0 %v720
    %825 = vmatprep.subr.bf16.mxu0 %v726
    %826 = vmatpush1.bf16.msra.mxu0 %v725
    %827 = vmatprep.subr.bf16.mxu0 0
    %828 = vmatpush1.bf16.msra.mxu0 0
    %829 = vmatprep.subr.bf16.mxu0 0
    %830 = vmatpush1.bf16.msra.mxu0 0
    %831 = vmatprep.subr.bf16.mxu0 0
    %832 = vmatpush1.bf16.msra.mxu0 0
    %833 = vmatprep.subr.bf16.mxu0 0
    %834 = vmatpush1.bf16.msra.mxu0 0
    %835 = vmatprep.subr.bf16.mxu0 0
    %836 = vmatpush1.bf16.msra.mxu0 0
    %837 = vmatprep.subr.bf16.mxu0 0
    %838 = vmatpush1.bf16.msra.mxu0 0
    %839 = vmatprep.subr.bf16.mxu0 0
    %840 = vmatpush1.bf16.msra.mxu0 0
    %841 = vmatprep.subr.bf16.mxu0 0
    %842 = vmatpush1.bf16.msra.mxu0 0
    %843 = vmatprep.mubr.bf16.mxu0 0
    %844 = vmatmul.mubr.bf16.gmra.mrb[0].mxu0 %v558
    %v845 = vpop.f32.mrb[0].mxu0
    %v846 = vadd.f32 %v505, %v845
    %v847 = vpop.f32.mrb[0].mxu0
    %v848 = vadd.f32 %v507, %v847
    %v849 = vpop.f32.mrb[0].mxu0
    %v850 = vadd.f32 %v509, %v849
    %v851 = vpop.f32.mrb[0].mxu0
    %v852 = vadd.f32 %v511, %v851
    %853 = vdwg.mxu0
    %854 = vmatprep.subr.bf16.mxu0 0
    %855 = vmatpush1.bf16.msra.mxu0 %v692
    %856 = vmatprep.subr.bf16.mxu0 0
    %857 = vmatpush1.bf16.msra.mxu0 %v697
    %858 = vmatprep.subr.bf16.mxu0 0
    %859 = vmatpush1.bf16.msra.mxu0 %v702
    %860 = vmatprep.subr.bf16.mxu0 0
    %861 = vmatpush1.bf16.msra.mxu0 %v707
    %862 = vmatprep.subr.bf16.mxu0 0
    %863 = vmatpush1.bf16.msra.mxu0 %v712
    %864 = vmatprep.subr.bf16.mxu0 0
    %865 = vmatpush1.bf16.msra.mxu0 %v717
    %866 = vmatprep.subr.bf16.mxu0 0
    %867 = vmatpush1.bf16.msra.mxu0 %v722
    %868 = vmatprep.subr.bf16.mxu0 0
    %869 = vmatpush1.bf16.msra.mxu0 %v727
    %870 = vmatprep.subr.bf16.mxu0 0
    %871 = vmatpush1.bf16.msra.mxu0 0
    %872 = vmatprep.subr.bf16.mxu0 0
    %873 = vmatpush1.bf16.msra.mxu0 0
    %874 = vmatprep.subr.bf16.mxu0 0
    %875 = vmatpush1.bf16.msra.mxu0 0
    %876 = vmatprep.subr.bf16.mxu0 0
    %877 = vmatpush1.bf16.msra.mxu0 0
    %878 = vmatprep.subr.bf16.mxu0 0
    %879 = vmatpush1.bf16.msra.mxu0 0
    %880 = vmatprep.subr.bf16.mxu0 0
    %881 = vmatpush1.bf16.msra.mxu0 0
    %882 = vmatprep.subr.bf16.mxu0 0
    %883 = vmatpush1.bf16.msra.mxu0 0
    %884 = vmatprep.subr.bf16.mxu0 0
    %885 = vmatpush1.bf16.msra.mxu0 0
    %886 = vmatprep.mubr.bf16.mxu0 0
    %887 = vmatmul.mubr.bf16.gmra.mrb[0].mxu0 %v558
    %v888 = vpop.f32.mrb[0].mxu0
    %v889 = vadd.f32 %v548, %v888
    %v890 = vpop.f32.mrb[0].mxu0
    %v891 = vpop.f32.mrb[0].mxu0
    %v892 = vadd.f32 %v551, %v891
    %v893 = vpop.f32.mrb[0].mxu0
    %894 = vdwg.mxu0
    %v895 = vld [vmem:[#allocation7] sm:$0xf]
    %v896 = vld [vmem:[#allocation7 + $0x4] sm:$0xf]
    %v897 = vld [vmem:[#allocation11 + $0x280] sm:$0xff]
    %v898 = vld [vmem:[#allocation11 + $0x288] sm:$0xff]
    %v899 = vld [vmem:[#allocation11 + $0x290] sm:$0xf]
    %v900 = vld [vmem:[#allocation11 + $0x294] sm:$0xff]
    %v901 = vld [vmem:[#allocation11 + $0x29c] sm:$0xff]
    %v902 = vld [vmem:[#allocation11 + $0x2a4] sm:$0xf]
    %v903 = vld [vmem:[#allocation11 + $0x2a8] sm:$0xff]
    %v904 = vld [vmem:[#allocation11 + $0x2b0] sm:$0xff]
    %v905 = vld [vmem:[#allocation11 + $0x2b8] sm:$0xf]
    %v906 = vld [vmem:[#allocation11 + $0x2bc] sm:$0xff]
    %v907 = vld [vmem:[#allocation11 + $0x2c4] sm:$0xff]
    %v908 = vld [vmem:[#allocation11 + $0x2cc] sm:$0xf]
    %v909 = vld [vmem:[#allocation11 + $0x2d0] sm:$0xff]
    %v910 = vld [vmem:[#allocation11 + $0x2d8] sm:$0xff]
    %v911 = vld [vmem:[#allocation11 + $0x2e0] sm:$0xf]
    %v912 = vld [vmem:[#allocation11 + $0x2e4] sm:$0xff]
    %v913 = vld [vmem:[#allocation11 + $0x2ec] sm:$0xff]
    %v914 = vld [vmem:[#allocation11 + $0x2f4] sm:$0xf]
    %v915 = vld [vmem:[#allocation11 + $0x2f8] sm:$0xff]
    %v916 = vld [vmem:[#allocation11 + $0x300] sm:$0xff]
    %v917 = vld [vmem:[#allocation11 + $0x308] sm:$0xf]
    %v918 = vld [vmem:[#allocation11 + $0x30c] sm:$0xff]
    %v919 = vld [vmem:[#allocation11 + $0x314] sm:$0xff]
    %v920 = vld [vmem:[#allocation11 + $0x31c] sm:$0xf]
    %v921 = vld [vmem:[#allocation11 + $0x320] sm:$0xff]
    %v922 = vld [vmem:[#allocation11 + $0x328] sm:$0xff]
    %v923 = vld [vmem:[#allocation11 + $0x330] sm:$0xf]
    %v924 = vld [vmem:[#allocation11 + $0x334] sm:$0xff]
    %v925 = vld [vmem:[#allocation11 + $0x33c] sm:$0xff]
    %v926 = vld [vmem:[#allocation11 + $0x344] sm:$0xf]
    %v927 = vld [vmem:[#allocation11 + $0x348] sm:$0xff]
    %v928 = vld [vmem:[#allocation11 + $0x350] sm:$0xff]
    %v929 = vld [vmem:[#allocation11 + $0x358] sm:$0xf]
    %v930 = vld [vmem:[#allocation11 + $0x35c] sm:$0xff]
    %v931 = vld [vmem:[#allocation11 + $0x364] sm:$0xff]
    %v932 = vld [vmem:[#allocation11 + $0x36c] sm:$0xf]
    %v933 = vld [vmem:[#allocation11 + $0x370] sm:$0xff]
    %v934 = vld [vmem:[#allocation11 + $0x378] sm:$0xff]
    %v935 = vld [vmem:[#allocation11 + $0x380] sm:$0xf]
    %v936 = vld [vmem:[#allocation11 + $0x384] sm:$0xff]
    %v937 = vld [vmem:[#allocation11 + $0x38c] sm:$0xff]
    %v938 = vld [vmem:[#allocation11 + $0x394] sm:$0xf]
    %v939 = vld [vmem:[#allocation11 + $0x398] sm:$0xff]
    %v940 = vld [vmem:[#allocation11 + $0x3a0] sm:$0xff]
    %v941 = vld [vmem:[#allocation11 + $0x3a8] sm:$0xf]
    %v942 = vld [vmem:[#allocation11 + $0x3ac] sm:$0xff]
    %v943 = vld [vmem:[#allocation11 + $0x3b4] sm:$0xff]
    %v944 = vld [vmem:[#allocation11 + $0x3bc] sm:$0xf]
    %v947 = vunpack.c.l.b16 %v895
    %v948 = vunpack.c.l.b16 %v896
    %v949 = vpack.c.b16 %v948, %v947
    %v999 = vunpack.c.l.b16 %v897
    %v1000 = vunpack.c.h.b16 %v897
    %v1001 = vunpack.c.l.b16 %v898
    %v1002 = vunpack.c.h.b16 %v898
    %v1003 = vunpack.c.l.b16 %v899
    %v1004 = vunpack.c.l.b16 %v900
    %v1005 = vunpack.c.h.b16 %v900
    %v1006 = vunpack.c.l.b16 %v901
    %v1007 = vunpack.c.h.b16 %v901
    %v1008 = vunpack.c.l.b16 %v902
    %v1009 = vunpack.c.l.b16 %v903
    %v1010 = vunpack.c.h.b16 %v903
    %v1011 = vunpack.c.l.b16 %v904
    %v1012 = vunpack.c.h.b16 %v904
    %v1013 = vunpack.c.l.b16 %v905
    %v1014 = vunpack.c.l.b16 %v906
    %v1015 = vunpack.c.h.b16 %v906
    %v1016 = vunpack.c.l.b16 %v907
    %v1017 = vunpack.c.h.b16 %v907
    %v1018 = vunpack.c.l.b16 %v908
    %v1019 = vunpack.c.l.b16 %v909
    %v1020 = vunpack.c.h.b16 %v909
    %v1021 = vunpack.c.l.b16 %v910
    %v1022 = vunpack.c.h.b16 %v910
    %v1023 = vunpack.c.l.b16 %v911
    %v1024 = vunpack.c.l.b16 %v912
    %v1025 = vunpack.c.h.b16 %v912
    %v1026 = vunpack.c.l.b16 %v913
    %v1027 = vunpack.c.h.b16 %v913
    %v1028 = vunpack.c.l.b16 %v914
    %v1029 = vunpack.c.l.b16 %v915
    %v1030 = vunpack.c.h.b16 %v915
    %v1031 = vunpack.c.l.b16 %v916
    %v1032 = vunpack.c.h.b16 %v916
    %v1033 = vunpack.c.l.b16 %v917
    %v1034 = vunpack.c.l.b16 %v918
    %v1035 = vunpack.c.h.b16 %v918
    %v1036 = vunpack.c.l.b16 %v919
    %v1037 = vunpack.c.h.b16 %v919
    %v1038 = vunpack.c.l.b16 %v920
    %v1039 = vunpack.c.l.b16 %v921
    %v1040 = vunpack.c.h.b16 %v921
    %v1041 = vunpack.c.l.b16 %v922
    %v1042 = vunpack.c.h.b16 %v922
    %v1043 = vunpack.c.l.b16 %v923
    %v1044 = vunpack.c.l.b16 %v924
    %v1045 = vunpack.c.h.b16 %v924
    %v1046 = vunpack.c.l.b16 %v925
    %v1047 = vunpack.c.h.b16 %v925
    %v1048 = vunpack.c.l.b16 %v926
    %v1049 = vunpack.c.l.b16 %v927
    %v1050 = vunpack.c.h.b16 %v927
    %v1051 = vunpack.c.l.b16 %v928
    %v1052 = vunpack.c.h.b16 %v928
    %v1053 = vunpack.c.l.b16 %v929
    %v1054 = vunpack.c.l.b16 %v930
    %v1055 = vunpack.c.h.b16 %v930
    %v1056 = vunpack.c.l.b16 %v931
    %v1057 = vunpack.c.h.b16 %v931
    %v1058 = vunpack.c.l.b16 %v932
    %v1059 = vunpack.c.l.b16 %v933
    %v1060 = vunpack.c.h.b16 %v933
    %v1061 = vunpack.c.l.b16 %v934
    %v1062 = vunpack.c.h.b16 %v934
    %v1063 = vunpack.c.l.b16 %v935
    %v1064 = vunpack.c.l.b16 %v936
    %v1065 = vunpack.c.h.b16 %v936
    %v1066 = vunpack.c.l.b16 %v937
    %v1067 = vunpack.c.h.b16 %v937
    %v1068 = vunpack.c.l.b16 %v938
    %v1069 = vunpack.c.l.b16 %v939
    %v1070 = vunpack.c.h.b16 %v939
    %v1071 = vunpack.c.l.b16 %v940
    %v1072 = vunpack.c.h.b16 %v940
    %v1073 = vunpack.c.l.b16 %v941
    %v1074 = vunpack.c.l.b16 %v942
    %v1075 = vunpack.c.h.b16 %v942
    %v1076 = vunpack.c.l.b16 %v943
    %v1077 = vunpack.c.h.b16 %v943
    %v1078 = vunpack.c.l.b16 %v944
    %v1079 = vpack.c.b16 %v1004, %v999
    %v1080 = vpack.c.b16 %v1005, %v1000
    %v1081 = vpack.c.b16 %v1006, %v1001
    %v1082 = vpack.c.b16 %v1007, %v1002
    %v1083 = vpack.c.b16 %v1008, %v1003
    %v1084 = vpack.c.b16 %v1014, %v1009
    %v1085 = vpack.c.b16 %v1015, %v1010
    %v1086 = vpack.c.b16 %v1016, %v1011
    %v1087 = vpack.c.b16 %v1017, %v1012
    %v1088 = vpack.c.b16 %v1018, %v1013
    %v1089 = vpack.c.b16 %v1024, %v1019
    %v1090 = vpack.c.b16 %v1025, %v1020
    %v1091 = vpack.c.b16 %v1026, %v1021
    %v1092 = vpack.c.b16 %v1027, %v1022
    %v1093 = vpack.c.b16 %v1028, %v1023
    %v1094 = vpack.c.b16 %v1034, %v1029
    %v1095 = vpack.c.b16 %v1035, %v1030
    %v1096 = vpack.c.b16 %v1036, %v1031
    %v1097 = vpack.c.b16 %v1037, %v1032
    %v1098 = vpack.c.b16 %v1038, %v1033
    %v1099 = vpack.c.b16 %v1044, %v1039
    %v1100 = vpack.c.b16 %v1045, %v1040
    %v1101 = vpack.c.b16 %v1046, %v1041
    %v1102 = vpack.c.b16 %v1047, %v1042
    %v1103 = vpack.c.b16 %v1048, %v1043
    %v1104 = vpack.c.b16 %v1054, %v1049
    %v1105 = vpack.c.b16 %v1055, %v1050
    %v1106 = vpack.c.b16 %v1056, %v1051
    %v1107 = vpack.c.b16 %v1057, %v1052
    %v1108 = vpack.c.b16 %v1058, %v1053
    %v1109 = vpack.c.b16 %v1064, %v1059
    %v1110 = vpack.c.b16 %v1065, %v1060
    %v1111 = vpack.c.b16 %v1066, %v1061
    %v1112 = vpack.c.b16 %v1067, %v1062
    %v1113 = vpack.c.b16 %v1068, %v1063
    %v1114 = vpack.c.b16 %v1074, %v1069
    %v1115 = vpack.c.b16 %v1075, %v1070
    %v1116 = vpack.c.b16 %v1076, %v1071
    %v1117 = vpack.c.b16 %v1077, %v1072
    %v1118 = vpack.c.b16 %v1078, %v1073
    %1159 = vmatprep.subr.bf16.mxu0 %v1080
    %1160 = vmatpush1.bf16.msra.mxu0 %v1079
    %1161 = vmatprep.subr.bf16.mxu0 %v1085
    %1162 = vmatpush1.bf16.msra.mxu0 %v1084
    %1163 = vmatprep.subr.bf16.mxu0 %v1090
    %1164 = vmatpush1.bf16.msra.mxu0 %v1089
    %1165 = vmatprep.subr.bf16.mxu0 %v1095
    %1166 = vmatpush1.bf16.msra.mxu0 %v1094
    %1167 = vmatprep.subr.bf16.mxu0 %v1100
    %1168 = vmatpush1.bf16.msra.mxu0 %v1099
    %1169 = vmatprep.subr.bf16.mxu0 %v1105
    %1170 = vmatpush1.bf16.msra.mxu0 %v1104
    %1171 = vmatprep.subr.bf16.mxu0 %v1110
    %1172 = vmatpush1.bf16.msra.mxu0 %v1109
    %1173 = vmatprep.subr.bf16.mxu0 %v1115
    %1174 = vmatpush1.bf16.msra.mxu0 %v1114
    %1175 = vmatprep.subr.bf16.mxu0 0
    %1176 = vmatpush1.bf16.msra.mxu0 0
    %1177 = vmatprep.subr.bf16.mxu0 0
    %1178 = vmatpush1.bf16.msra.mxu0 0
    %1179 = vmatprep.subr.bf16.mxu0 0
    %1180 = vmatpush1.bf16.msra.mxu0 0
    %1181 = vmatprep.subr.bf16.mxu0 0
    %1182 = vmatpush1.bf16.msra.mxu0 0
    %1183 = vmatprep.subr.bf16.mxu0 0
    %1184 = vmatpush1.bf16.msra.mxu0 0
    %1185 = vmatprep.subr.bf16.mxu0 0
    %1186 = vmatpush1.bf16.msra.mxu0 0
    %1187 = vmatprep.subr.bf16.mxu0 0
    %1188 = vmatpush1.bf16.msra.mxu0 0
    %1189 = vmatprep.subr.bf16.mxu0 0
    %1190 = vmatpush1.bf16.msra.mxu0 0
    %1191 = vmatprep.mubr.bf16.mxu0 0
    %1192 = vmatmul.mubr.bf16.gmra.mrb[0].mxu0 %v949
    %v1193 = vpop.f32.mrb[0].mxu0
    %v1194 = vadd.f32 0.0, %v1193
    %v1195 = vpop.f32.mrb[0].mxu0
    %v1196 = vadd.f32 0.0, %v1195
    %v1197 = vpop.f32.mrb[0].mxu0
    %v1198 = vadd.f32 0.0, %v1197
    %v1199 = vpop.f32.mrb[0].mxu0
    %v1200 = vadd.f32 0.0, %v1199
    %1201 = vdwg.mxu0
    %1202 = vmatprep.subr.bf16.mxu0 %v1082
    %1203 = vmatpush1.bf16.msra.mxu0 %v1081
    %1204 = vmatprep.subr.bf16.mxu0 %v1087
    %1205 = vmatpush1.bf16.msra.mxu0 %v1086
    %1206 = vmatprep.subr.bf16.mxu0 %v1092
    %1207 = vmatpush1.bf16.msra.mxu0 %v1091
    %1208 = vmatprep.subr.bf16.mxu0 %v1097
    %1209 = vmatpush1.bf16.msra.mxu0 %v1096
    %1210 = vmatprep.subr.bf16.mxu0 %v1102
    %1211 = vmatpush1.bf16.msra.mxu0 %v1101
    %1212 = vmatprep.subr.bf16.mxu0 %v1107
    %1213 = vmatpush1.bf16.msra.mxu0 %v1106
    %1214 = vmatprep.subr.bf16.mxu0 %v1112
    %1215 = vmatpush1.bf16.msra.mxu0 %v1111
    %1216 = vmatprep.subr.bf16.mxu0 %v1117
    %1217 = vmatpush1.bf16.msra.mxu0 %v1116
    %1218 = vmatprep.subr.bf16.mxu0 0
    %1219 = vmatpush1.bf16.msra.mxu0 0
    %1220 = vmatprep.subr.bf16.mxu0 0
    %1221 = vmatpush1.bf16.msra.mxu0 0
    %1222 = vmatprep.subr.bf16.mxu0 0
    %1223 = vmatpush1.bf16.msra.mxu0 0
    %1224 = vmatprep.subr.bf16.mxu0 0
    %1225 = vmatpush1.bf16.msra.mxu0 0
    %1226 = vmatprep.subr.bf16.mxu0 0
    %1227 = vmatpush1.bf16.msra.mxu0 0
    %1228 = vmatprep.subr.bf16.mxu0 0
    %1229 = vmatpush1.bf16.msra.mxu0 0
    %1230 = vmatprep.subr.bf16.mxu0 0
    %1231 = vmatpush1.bf16.msra.mxu0 0
    %1232 = vmatprep.subr.bf16.mxu0 0
    %1233 = vmatpush1.bf16.msra.mxu0 0
    %1234 = vmatprep.mubr.bf16.mxu0 0
    %1235 = vmatmul.mubr.bf16.gmra.mrb[0].mxu0 %v949
    %v1236 = vpop.f32.mrb[0].mxu0
    %v1237 = vadd.f32 0.0, %v1236
    %v1238 = vpop.f32.mrb[0].mxu0
    %v1239 = vadd.f32 0.0, %v1238
    %v1240 = vpop.f32.mrb[0].mxu0
    %v1241 = vadd.f32 0.0, %v1240
    %v1242 = vpop.f32.mrb[0].mxu0
    %v1243 = vadd.f32 0.0, %v1242
    %1244 = vdwg.mxu0
    %1245 = vmatprep.subr.bf16.mxu0 0
    %1246 = vmatpush1.bf16.msra.mxu0 %v1083
    %1247 = vmatprep.subr.bf16.mxu0 0
    %1248 = vmatpush1.bf16.msra.mxu0 %v1088
    %1249 = vmatprep.subr.bf16.mxu0 0
    %1250 = vmatpush1.bf16.msra.mxu0 %v1093
    %1251 = vmatprep.subr.bf16.mxu0 0
    %1252 = vmatpush1.bf16.msra.mxu0 %v1098
    %1253 = vmatprep.subr.bf16.mxu0 0
    %1254 = vmatpush1.bf16.msra.mxu0 %v1103
    %1255 = vmatprep.subr.bf16.mxu0 0
    %1256 = vmatpush1.bf16.msra.mxu0 %v1108
    %1257 = vmatprep.subr.bf16.mxu0 0
    %1258 = vmatpush1.bf16.msra.mxu0 %v1113
    %1259 = vmatprep.subr.bf16.mxu0 0
    %1260 = vmatpush1.bf16.msra.mxu0 %v1118
    %1261 = vmatprep.subr.bf16.mxu0 0
    %1262 = vmatpush1.bf16.msra.mxu0 0
    %1263 = vmatprep.subr.bf16.mxu0 0
    %1264 = vmatpush1.bf16.msra.mxu0 0
    %1265 = vmatprep.subr.bf16.mxu0 0
    %1266 = vmatpush1.bf16.msra.mxu0 0
    %1267 = vmatprep.subr.bf16.mxu0 0
    %1268 = vmatpush1.bf16.msra.mxu0 0
    %1269 = vmatprep.subr.bf16.mxu0 0
    %1270 = vmatpush1.bf16.msra.mxu0 0
    %1271 = vmatprep.subr.bf16.mxu0 0
    %1272 = vmatpush1.bf16.msra.mxu0 0
    %1273 = vmatprep.subr.bf16.mxu0 0
    %1274 = vmatpush1.bf16.msra.mxu0 0
    %1275 = vmatprep.subr.bf16.mxu0 0
    %1276 = vmatpush1.bf16.msra.mxu0 0
    %1277 = vmatprep.mubr.bf16.mxu0 0
    %1278 = vmatmul.mubr.bf16.gmra.mrb[0].mxu0 %v949
    %v1279 = vpop.f32.mrb[0].mxu0
    %v1280 = vadd.f32 0.0, %v1279
    %v1281 = vpop.f32.mrb[0].mxu0
    %v1282 = vpop.f32.mrb[0].mxu0
    %v1283 = vadd.f32 0.0, %v1282
    %v1284 = vpop.f32.mrb[0].mxu0
    %1285 = vdwg.mxu0
    %v1286 = vadd.f32 %v803, %v1194
    %v1287 = vadd.f32 %v805, %v1196
    %v1288 = vadd.f32 %v846, %v1237
    %v1289 = vadd.f32 %v848, %v1239
    %v1290 = vadd.f32 %v889, %v1280
    %v1291 = vadd.f32 %v807, %v1198
    %v1292 = vadd.f32 %v809, %v1200
    %v1293 = vadd.f32 %v850, %v1241
    %v1294 = vadd.f32 %v852, %v1243
    %v1295 = vadd.f32 %v892, %v1283
    %v1296 = vld [vmem:[%s6] sm:$0x1f]
    %v1298 = vlaneseq
    %v1299 = vshrl.u32 %v1298, 7
    %v1300 = vsub.s32 0, %v1299
    %v1301 = vrot.slane %v1296, %v1300
    %v1302 = vlaneseq
    %v1303 = vshrl.u32 %v1302, 7
    %v1304 = vsub.s32 1, %v1303
    %v1305 = vrot.slane %v1296, %v1304
    %v1306 = vlaneseq
    %v1307 = vshrl.u32 %v1306, 7
    %v1308 = vsub.s32 2, %v1307
    %v1309 = vrot.slane %v1296, %v1308
    %v1310 = vlaneseq
    %v1311 = vshrl.u32 %v1310, 7
    %v1312 = vsub.s32 3, %v1311
    %v1313 = vrot.slane %v1296, %v1312
    %v1314 = vlaneseq
    %v1315 = vshrl.u32 %v1314, 7
    %v1316 = vsub.s32 4, %v1315
    %v1317 = vrot.slane %v1296, %v1316
    %v1323 = vadd.f32 %v1286, %v1301
    %v1324 = vadd.f32 %v1287, %v1305
    %v1325 = vadd.f32 %v1288, %v1309
    %v1326 = vadd.f32 %v1289, %v1313
    %v1327 = vadd.f32 %v1290, %v1317
    %v1328 = vadd.f32 %v1291, %v1301
    %v1329 = vadd.f32 %v1292, %v1305
    %v1330 = vadd.f32 %v1293, %v1309
    %v1331 = vadd.f32 %v1294, %v1313
    %v1332 = vadd.f32 %v1295, %v1317
    %v1333 = vxor.u32 %v1323, 2147483648
    %v1334 = vxor.u32 %v1328, 2147483648
    %v1335 = vmul.f32 %v1333, 1.442695
    %v1336 = vpow.pop %v1335
    %v1337 = vmul.f32 %v1334, 1.442695
    %v1338 = vpow.pop %v1337
    %v1339 = vadd.f32 %v1336, 1.0
    %v1340 = vadd.f32 %v1338, 1.0
    %v1341 = vrcp.pop %v1339
    %v1342 = vmul.f32 1.0, %v1341
    %v1343 = vrcp.pop %v1340
    %v1344 = vmul.f32 1.0, %v1343
    %v1345 = vxor.u32 %v1324, 2147483648
    %v1346 = vxor.u32 %v1329, 2147483648
    %v1347 = vmul.f32 %v1345, 1.442695
    %v1348 = vpow.pop %v1347
    %v1349 = vmul.f32 %v1346, 1.442695
    %v1350 = vpow.pop %v1349
    %v1351 = vadd.f32 %v1348, 1.0
    %v1352 = vadd.f32 %v1350, 1.0
    %v1353 = vrcp.pop %v1351
    %v1354 = vmul.f32 1.0, %v1353
    %v1355 = vrcp.pop %v1352
    %v1356 = vmul.f32 1.0, %v1355
    %v1357 = vtanh.pop %v1325
    %v1358 = vtanh.pop %v1330
    %v1359 = vxor.u32 %v1326, 2147483648
    %v1360 = vxor.u32 %v1331, 2147483648
    %v1361 = vmul.f32 %v1359, 1.442695
    %v1362 = vpow.pop %v1361
    %v1363 = vmul.f32 %v1360, 1.442695
    %v1364 = vpow.pop %v1363
    %v1365 = vadd.f32 %v1362, 1.0
    %v1366 = vadd.f32 %v1364, 1.0
    %v1367 = vrcp.pop %v1365
    %v1368 = vmul.f32 1.0, %v1367
    %v1369 = vrcp.pop %v1366
    %v1370 = vmul.f32 1.0, %v1369
    %v1371 = vxor.u32 %v1327, 2147483648
    %v1372 = vxor.u32 %v1332, 2147483648
    %v1373 = vmul.f32 %v1371, 1.442695
    %v1374 = vpow.pop %v1373
    %v1375 = vmul.f32 %v1372, 1.442695
    %v1376 = vpow.pop %v1375
    %v1377 = vadd.f32 %v1374, 1.0
    %v1378 = vadd.f32 %v1376, 1.0
    %v1379 = vrcp.pop %v1377
    %v1380 = vmul.f32 1.0, %v1379
    %v1381 = vrcp.pop %v1378
    %v1382 = vmul.f32 1.0, %v1381
    %v1383 = vmul.f32 %v1342, %v1357
    %v1384 = vmul.f32 %v1344, %v1358
    %v1385 = vld [vmem:[#allocation8] sm:$0xff]
    %v1386 = vld [vmem:[#allocation8 + $0x8] sm:$0xff]
    %v1387 = vmul.f32 %v1368, %v1385
    %v1388 = vmul.f32 %v1370, %v1386
    %v1389 = vadd.f32 %v1383, %v1387
    %v1390 = vadd.f32 %v1384, %v1388
    %v1391 = vld [vmem:[#allocation10] sm:$0xff]
    %v1392 = vld [vmem:[#allocation10 + $0x8] sm:$0xff]
    %v1393 = vmul.f32 %v1380, %v1391
    %v1394 = vmul.f32 %v1382, %v1392
    %v1395 = vadd.f32 %v1389, %v1393
    %v1396 = vadd.f32 %v1390, %v1394
    %v1397 = vtanh.pop %v1395
    %v1398 = vtanh.pop %v1396
    %v1399 = vmul.f32 %v1354, %v1397
    %v1400 = vmul.f32 %v1356, %v1398
    %1401 = vst [vmem:[#allocation13] sm:$0xff] %v1399
    %1402 = vst [vmem:[#allocation13 + $0x8] sm:$0xff] %v1400
    %1403 = vst [vmem:[#allocation14] sm:$0xff] %v1395
    %1404 = vst [vmem:[#allocation14 + $0x8] sm:$0xff] %v1396
    // Predicated region
    $region54: #{tpu_custom_call.1} parent=1 // pred_check
      _
    $region55: #{tpu_custom_call.1} parent=1 // pred_check_branch
      %1406 = sbr.rel (0) target = $region57
    $region56: #{tpu_custom_call.1} parent=1 // pred_region
      %s1408 = ssub.s32 256, 256
      %1409 = vsyncadd [#allocation4], %s1408
      %s1410 = sshll.u32 [#allocation13], 4
      %s1411 = int_to_ptr.vmem [resolvable:$true] %s1410
      %1416 = dma.vmem_to_hbm [thread:$0]  %s1411, 256, %s7, [#allocation4], 128, 128, 8
    $region57: #{tpu_custom_call.1} parent=1 // pred_fallthru
      _
    // Predicated region
    $region58: #{tpu_custom_call.1} parent=1 // pred_check
      _
    $region59: #{tpu_custom_call.1} parent=1 // pred_check_branch
      %1418 = sbr.rel (0) target = $region61
    $region60: #{tpu_custom_call.1} parent=1 // pred_region
      %s1420 = ssub.s32 256, 256
      %1421 = vsyncadd [#allocation15], %s1420
      %s1422 = sshll.u32 [#allocation14], 4
      %s1423 = int_to_ptr.vmem [resolvable:$true] %s1422
      %1428 = dma.vmem_to_hbm [thread:$0]  %s1423, 256, %s8, [#allocation15], 128, 128, 8
    $region61: #{tpu_custom_call.1} parent=1 // pred_fallthru
      _
    // Predicated region
    $region62: #{tpu_custom_call.1} parent=1 // pred_check
      _
    $region63: #{tpu_custom_call.1} parent=1 // pred_check_branch
      %1430 = sbr.rel (0) target = $region65
    $region64: #{tpu_custom_call.1} parent=1 // pred_region
      %1431 = dma.done [#allocation4], 256
    $region65: #{tpu_custom_call.1} parent=1 // pred_fallthru
      _
    // Predicated region
    $region66: #{tpu_custom_call.1} parent=1 // pred_check
      _
    $region67: #{tpu_custom_call.1} parent=1 // pred_check_branch
      %1433 = sbr.rel (0) target = $region69
    $region68: #{tpu_custom_call.1} parent=1 // pred_region
      %1434 = dma.done [#allocation15], 256
    $region69: #{tpu_custom_call.1} parent=1 // pred_fallthru
      _
    %1435 = vsyncpa [#allocation3], 1
    %1436 = vsyncpa [#allocation6], 1
    %1437 = vsyncpa [#allocation9], 1
    %1438 = vsyncpa [#allocation12], 1
    %1439 = vsyncpa [#allocation4], 1
    %1440 = vsyncpa [#allocation15], 1

</llo_original>
